<compile_context>
chip_gen: v6e
topology: v6e:2x2x1
jax: 0.10.0
libtpu: 0.0.40
codegen_flags: <defaults>
</compile_context>

<pallas_src>
import functools
import math

import jax
import jax.numpy as jnp
from jax.experimental import pallas as pl
from jax.experimental.pallas import tpu as pltpu


# ---------------------------------------------------------------------------
# Kernel
# ---------------------------------------------------------------------------
def _layer_norm(x, gamma, beta, eps=1e-5):
    # one-pass statistics: var = E[x^2] - mean^2
    mean = jnp.mean(x, axis=-1, keepdims=True)
    mean_sq = jnp.mean(x * x, axis=-1, keepdims=True)
    var = mean_sq - mean * mean
    return (x - mean) * jax.lax.rsqrt(var + eps) * gamma + beta


def encoder_layer_kernel(x_ref,
                         wqkv_ref, bqkv_ref,
                         wo_ref, bo_ref,
                         w1_ref, b1_ref,
                         w2_ref, b2_ref,
                         g1_ref, beta1_ref,
                         g2_ref, beta2_ref,
                         out_ref, *, nhead):
    x = x_ref[0]                                   # (S, E) f32 — one batch element
    S, E = x.shape
    hd = E // nhead

    # ---- fused QKV in-projection: one MXU pass, bf16 operands, f32 accumulate.
    #      (1/sqrt(hd) already folded into the q columns on the host)
    qkv = jnp.dot(x.astype(jnp.bfloat16), wqkv_ref[...],
                  preferred_element_type=jnp.float32) + bqkv_ref[...]   # (S, 3E)

    # ---- per-head scaled dot-product attention (statically unrolled; these are
    #      the same H tiny MXU passes a batched einsum would issue, minus the
    #      broadcast copy of x and any in-kernel reshape/transpose).
    ctx_heads = []
    for h in range(nhead):
        q_h = qkv[:, h * hd:(h + 1) * hd].astype(jnp.bfloat16)              # (S, hd)
        k_h = qkv[:, E + h * hd:E + (h + 1) * hd].astype(jnp.bfloat16)      # (S, hd)
        v_h = qkv[:, 2 * E + h * hd:2 * E + (h + 1) * hd].astype(jnp.bfloat16)

        # q_h @ k_h^T expressed via dimension numbers (no materialized transpose)
        s = jax.lax.dot_general(q_h, k_h, (((1,), (1,)), ((), ())),
                                preferred_element_type=jnp.float32)         # (S, S)
        s = s - jnp.max(s, axis=-1, keepdims=True)
        p = jnp.exp(s)
        p = p * pl.reciprocal(jnp.sum(p, axis=-1, keepdims=True), approx=True)
        ctx_heads.append(
            jnp.dot(p.astype(jnp.bfloat16), v_h,
                    preferred_element_type=jnp.float32))                    # (S, hd)

    # ---- head merge along lanes + single out-projection matmul
    ctx = jnp.concatenate(ctx_heads, axis=-1).astype(jnp.bfloat16)          # (S, E)
    attn = jnp.dot(ctx, wo_ref[...],
                   preferred_element_type=jnp.float32) + bo_ref[...]        # (S, E)

    # dropout1 is identity in eval mode
    x1 = _layer_norm(x + attn, g1_ref[...], beta1_ref[...])

    # ---- feed forward (weights pre-transposed + bf16 on the host)
    h1 = jnp.maximum(
        jnp.dot(x1.astype(jnp.bfloat16), w1_ref[...],
                preferred_element_type=jnp.float32) + b1_ref[...], 0.0)
    # inner dropout is identity in eval mode
    ff = jnp.dot(h1.astype(jnp.bfloat16), w2_ref[...],
                 preferred_element_type=jnp.float32) + b2_ref[...]

    # dropout2 is identity in eval mode
    out_ref[0] = _layer_norm(x1 + ff, g2_ref[...], beta2_ref[...])


# ---------------------------------------------------------------------------
# Wrapper (host-side layout plumbing is free; done once per call under jit)
# ---------------------------------------------------------------------------
def transformer_encoder_layer(src_sbe, params, nhead):
    """src_sbe: (S, B, E) float32 (PyTorch MHA layout). Returns (S, B, E)."""
    S, B, E = src_sbe.shape
    hd = E // nhead
    scale = 1.0 / math.sqrt(hd)

    # Packed QKV weight: (E, 3E) with columns [q_h0..q_hH | k_... | v_...]
    # (head-major within each third, same ordering as torch MHA); q scale folded.
    q_scale = jnp.concatenate(
        [jnp.full((E,), scale, jnp.float32), jnp.ones((2 * E,), jnp.float32)])
    wqkv2d = (params["wqkv"].T * q_scale[None, :]).astype(jnp.bfloat16)   # (E, 3E)
    bqkv = params["bqkv"] * q_scale[None, :]                              # (1, 3E) f32

    wo_t = params["wo"].T.astype(jnp.bfloat16)    # (H*hd, E)
    w1_t = params["w1"].T.astype(jnp.bfloat16)    # (E, F)
    w2_t = params["w2"].T.astype(jnp.bfloat16)    # (F, E)

    x = jnp.transpose(src_sbe, (1, 0, 2))         # (B, S, E)

    def full(arr):
        nd = arr.ndim
        return pl.BlockSpec(arr.shape, lambda b, _n=nd: (0,) * _n)

    out = pl.pallas_call(
        functools.partial(encoder_layer_kernel, nhead=nhead),
        out_shape=jax.ShapeDtypeStruct((B, S, E), jnp.float32),
        grid_spec=pltpu.PrefetchScalarGridSpec(
            num_scalar_prefetch=0,
            grid=(B,),
            in_specs=[
                pl.BlockSpec((1, S, E), lambda b: (b, 0, 0)),   # activations
                full(wqkv2d), full(bqkv),
                full(wo_t), full(params["bo"]),
                full(w1_t), full(params["b1"]),
                full(w2_t), full(params["b2"]),
                full(params["g1"]), full(params["beta1"]),
                full(params["g2"]), full(params["beta2"]),
            ],
            out_specs=pl.BlockSpec((1, S, E), lambda b: (b, 0, 0)),
        ),
        compiler_params=pltpu.CompilerParams(
            dimension_semantics=("parallel",),        # shards batch across v7x's 2 TCs
            vmem_limit_bytes=32 * 1024 * 1024),
    )(x, wqkv2d, bqkv, wo_t, params["bo"], w1_t, params["b1"],
      w2_t, params["b2"], params["g1"], params["beta1"],
      params["g2"], params["beta2"])

    return jnp.transpose(out, (1, 0, 2))              # back to (S, B, E)


# ---------------------------------------------------------------------------
# Pure-JAX reference (same math, f32) for a correctness check
# ---------------------------------------------------------------------------
def reference(src_sbe, params, nhead):
    S, B, E = src_sbe.shape
    hd = E // nhead
    x = jnp.transpose(src_sbe, (1, 0, 2))            # (B, S, E)

    qkv = jnp.einsum("bse,fe->bsf", x, params["wqkv"]) + params["bqkv"][0]
    q, k, v = qkv[..., :E], qkv[..., E:2 * E], qkv[..., 2 * E:]
    q = q.reshape(B, S, nhead, hd).transpose(0, 2, 1, 3) / math.sqrt(hd)
    k = k.reshape(B, S, nhead, hd).transpose(0, 2, 1, 3)
    v = v.reshape(B, S, nhead, hd).transpose(0, 2, 1, 3)
    s = jnp.einsum("bhqd,bhkd->bhqk", q, k)
    p = jax.nn.softmax(s, axis=-1)
    a = jnp.einsum("bhqk,bhkd->bhqd", p, v).transpose(0, 2, 1, 3).reshape(B, S, E)
    a = jnp.einsum("bse,fe->bsf", a, params["wo"]) + params["bo"][0]

    def ln(y, g, b):
        m = jnp.mean(y, axis=-1, keepdims=True)
        vv = jnp.mean((y - m) ** 2, axis=-1, keepdims=True)
        return (y - m) * jax.lax.rsqrt(vv + 1e-5) * g[0] + b[0]

    x1 = ln(x + a, params["g1"], params["beta1"])
    h1 = jax.nn.relu(jnp.einsum("bse,fe->bsf", x1, params["w1"]) + params["b1"][0])
    ff = jnp.einsum("bsf,ef->bse", h1, params["w2"]) + params["b2"][0]
    x2 = ln(x1 + ff, params["g2"], params["beta2"])
    return jnp.transpose(x2, (1, 0, 2))


# ---------------------------------------------------------------------------
# Main
# ---------------------------------------------------------------------------
if __name__ == "__main__":
    S, B, E = 8, 2, 32          # seq, batch, d_model   (E % NHEAD == 0)
    NHEAD = 4
    FF = 64

    key = jax.random.PRNGKey(0)
    keys = jax.random.split(key, 10)

    params = {
        "wqkv": 0.05 * jax.random.normal(keys[0], (3 * E, E), jnp.float32),
        "bqkv": 0.05 * jax.random.normal(keys[1], (1, 3 * E), jnp.float32),
        "wo":   0.05 * jax.random.normal(keys[2], (E, E), jnp.float32),
        "bo":   0.05 * jax.random.normal(keys[3], (1, E), jnp.float32),
        "w1":   0.05 * jax.random.normal(keys[4], (FF, E), jnp.float32),
        "b1":   0.05 * jax.random.normal(keys[5], (1, FF), jnp.float32),
        "w2":   0.05 * jax.random.normal(keys[6], (E, FF), jnp.float32),
        "b2":   0.05 * jax.random.normal(keys[7], (1, E), jnp.float32),
        "g1":   jnp.ones((1, E), jnp.float32),
        "beta1": jnp.zeros((1, E), jnp.float32),
        "g2":   jnp.ones((1, E), jnp.float32),
        "beta2": jnp.zeros((1, E), jnp.float32),
    }

    src = jax.random.normal(keys[8], (S, B, E), jnp.float32)

    run = jax.jit(functools.partial(transformer_encoder_layer, nhead=NHEAD))
    out = jax.block_until_ready(run(src, params))

    ref = reference(src, params, NHEAD)
    assert out.shape == (S, B, E)
    # tolerance accounts for bf16 MXU operands (f32 accumulation) and the EUP
    # approximate reciprocal in the softmax denominator
    assert jnp.allclose(out, ref, atol=2e-2, rtol=2e-2), "mismatch vs reference"

    # TODO(synk): attn_mask / key_padding_mask branches and training-mode dropout
    # are not implemented (module defaults: masks=None, dropout identity in eval).
    print("KERNEL_OK")
</pallas_src>

<mosaic_0001>
module attributes {stable_mosaic.version = 11 : i64} {
  func.func @encoder_layer_kernel(%arg0: i32, %arg1: memref<1x8x32xf32, #tpu.memory_space<vmem>>, %arg2: memref<32x96xbf16, #tpu.memory_space<vmem>>, %arg3: memref<1x96xf32, #tpu.memory_space<vmem>>, %arg4: memref<32x32xbf16, #tpu.memory_space<vmem>>, %arg5: memref<1x32xf32, #tpu.memory_space<vmem>>, %arg6: memref<32x64xbf16, #tpu.memory_space<vmem>>, %arg7: memref<1x64xf32, #tpu.memory_space<vmem>>, %arg8: memref<64x32xbf16, #tpu.memory_space<vmem>>, %arg9: memref<1x32xf32, #tpu.memory_space<vmem>>, %arg10: memref<1x32xf32, #tpu.memory_space<vmem>>, %arg11: memref<1x32xf32, #tpu.memory_space<vmem>>, %arg12: memref<1x32xf32, #tpu.memory_space<vmem>>, %arg13: memref<1x32xf32, #tpu.memory_space<vmem>>, %arg14: memref<1x8x32xf32, #tpu.memory_space<vmem>>) attributes {dimension_semantics = [#tpu.dimension_semantics<parallel>], iteration_bounds = array<i64: 2>, scalar_prefetch = 0 : i64, scratch_operands = 0 : i64, tpu.core_type = #tpu.core_type<tc>, window_params = [{transform_indices = @transform_0, window_bounds = array<i64: 1, 8, 32>}, {pipeline_mode = #tpu.pipeline_mode<synchronous>, transform_indices = @transform_1, window_bounds = array<i64: 32, 96>}, {pipeline_mode = #tpu.pipeline_mode<synchronous>, transform_indices = @transform_2, window_bounds = array<i64: 1, 96>}, {pipeline_mode = #tpu.pipeline_mode<synchronous>, transform_indices = @transform_3, window_bounds = array<i64: 32, 32>}, {pipeline_mode = #tpu.pipeline_mode<synchronous>, transform_indices = @transform_4, window_bounds = array<i64: 1, 32>}, {pipeline_mode = #tpu.pipeline_mode<synchronous>, transform_indices = @transform_5, window_bounds = array<i64: 32, 64>}, {pipeline_mode = #tpu.pipeline_mode<synchronous>, transform_indices = @transform_6, window_bounds = array<i64: 1, 64>}, {pipeline_mode = #tpu.pipeline_mode<synchronous>, transform_indices = @transform_7, window_bounds = array<i64: 64, 32>}, {pipeline_mode = #tpu.pipeline_mode<synchronous>, transform_indices = @transform_8, window_bounds = array<i64: 1, 32>}, {pipeline_mode = #tpu.pipeline_mode<synchronous>, transform_indices = @transform_9, window_bounds = array<i64: 1, 32>}, {pipeline_mode = #tpu.pipeline_mode<synchronous>, transform_indices = @transform_10, window_bounds = array<i64: 1, 32>}, {pipeline_mode = #tpu.pipeline_mode<synchronous>, transform_indices = @transform_11, window_bounds = array<i64: 1, 32>}, {pipeline_mode = #tpu.pipeline_mode<synchronous>, transform_indices = @transform_12, window_bounds = array<i64: 1, 32>}, {transform_indices = @transform_13, window_bounds = array<i64: 1, 8, 32>}]} {
    %c0 = arith.constant 0 : index
    %c0_0 = arith.constant 0 : index
    %c0_1 = arith.constant 0 : index
    %0 = vector.load %arg1[%c0, %c0_0, %c0_1] : memref<1x8x32xf32, #tpu.memory_space<vmem>>, vector<1x8x32xf32>
    %1 = vector.shape_cast %0 : vector<1x8x32xf32> to vector<8x32xf32>
    %2 = arith.truncf %1 : vector<8x32xf32> to vector<8x32xbf16>
    %c0_2 = arith.constant 0 : index
    %c0_3 = arith.constant 0 : index
    %3 = vector.load %arg2[%c0_2, %c0_3] : memref<32x96xbf16, #tpu.memory_space<vmem>>, vector<32x96xbf16>
    %cst = arith.constant dense<0.000000e+00> : vector<8x96xf32>
    %4 = tpu.matmul %2, %3, %cst {dimension_numbers = #tpu.dot_dimension_numbers<[1], [0], [0], [1], [0, 0, 1, 1], [], []>} : vector<8x32xbf16>, vector<32x96xbf16>, vector<8x96xf32> -> vector<8x96xf32>
    %c0_4 = arith.constant 0 : index
    %c0_5 = arith.constant 0 : index
    %5 = vector.load %arg3[%c0_4, %c0_5] : memref<1x96xf32, #tpu.memory_space<vmem>>, vector<1x96xf32>
    %6 = vector.broadcast %5 : vector<1x96xf32> to vector<8x96xf32>
    %7 = arith.addf %4, %6 : vector<8x96xf32>
    %8 = vector.extract_strided_slice %7 {offsets = [0, 0], sizes = [8, 8], strides = [1, 1]} : vector<8x96xf32> to vector<8x8xf32>
    %9 = arith.truncf %8 : vector<8x8xf32> to vector<8x8xbf16>
    %10 = vector.extract_strided_slice %7 {offsets = [0, 32], sizes = [8, 8], strides = [1, 1]} : vector<8x96xf32> to vector<8x8xf32>
    %11 = arith.truncf %10 : vector<8x8xf32> to vector<8x8xbf16>
    %12 = vector.extract_strided_slice %7 {offsets = [0, 64], sizes = [8, 8], strides = [1, 1]} : vector<8x96xf32> to vector<8x8xf32>
    %13 = arith.truncf %12 : vector<8x8xf32> to vector<8x8xbf16>
    %cst_6 = arith.constant dense<0.000000e+00> : vector<8x8xf32>
    %14 = tpu.matmul %9, %11, %cst_6 {dimension_numbers = #tpu.dot_dimension_numbers<[1], [1], [0], [0], [0, 0, 1, 0], [], []>} : vector<8x8xbf16>, vector<8x8xbf16>, vector<8x8xf32> -> vector<8x8xf32>
    %cst_7 = arith.constant dense<0xFF800000> : vector<8xf32>
    %15 = vector.multi_reduction <maximumf>, %14, %cst_7 [1] : vector<8x8xf32> to vector<8xf32>
    %16 = vector.shape_cast %15 : vector<8xf32> to vector<8x1xf32>
    %17 = vector.broadcast %16 : vector<8x1xf32> to vector<8x8xf32>
    %18 = arith.subf %14, %17 : vector<8x8xf32>
    %19 = math.exp %18 : vector<8x8xf32>
    %cst_8 = arith.constant dense<0.000000e+00> : vector<8xf32>
    %20 = vector.multi_reduction <add>, %19, %cst_8 [1] : vector<8x8xf32> to vector<8xf32>
    %21 = vector.shape_cast %20 : vector<8xf32> to vector<8x1xf32>
    %22 = tpu.reciprocal %21 {approx = true} : vector<8x1xf32> -> vector<8x1xf32>
    %23 = vector.broadcast %22 : vector<8x1xf32> to vector<8x8xf32>
    %24 = arith.mulf %19, %23 : vector<8x8xf32>
    %25 = arith.truncf %24 : vector<8x8xf32> to vector<8x8xbf16>
    %cst_9 = arith.constant dense<0.000000e+00> : vector<8x8xf32>
    %26 = tpu.matmul %25, %13, %cst_9 {dimension_numbers = #tpu.dot_dimension_numbers<[1], [0], [0], [1], [0, 0, 1, 1], [], []>} : vector<8x8xbf16>, vector<8x8xbf16>, vector<8x8xf32> -> vector<8x8xf32>
    %27 = vector.extract_strided_slice %7 {offsets = [0, 8], sizes = [8, 8], strides = [1, 1]} : vector<8x96xf32> to vector<8x8xf32>
    %28 = arith.truncf %27 : vector<8x8xf32> to vector<8x8xbf16>
    %29 = vector.extract_strided_slice %7 {offsets = [0, 40], sizes = [8, 8], strides = [1, 1]} : vector<8x96xf32> to vector<8x8xf32>
    %30 = arith.truncf %29 : vector<8x8xf32> to vector<8x8xbf16>
    %31 = vector.extract_strided_slice %7 {offsets = [0, 72], sizes = [8, 8], strides = [1, 1]} : vector<8x96xf32> to vector<8x8xf32>
    %32 = arith.truncf %31 : vector<8x8xf32> to vector<8x8xbf16>
    %cst_10 = arith.constant dense<0.000000e+00> : vector<8x8xf32>
    %33 = tpu.matmul %28, %30, %cst_10 {dimension_numbers = #tpu.dot_dimension_numbers<[1], [1], [0], [0], [0, 0, 1, 0], [], []>} : vector<8x8xbf16>, vector<8x8xbf16>, vector<8x8xf32> -> vector<8x8xf32>
    %cst_11 = arith.constant dense<0xFF800000> : vector<8xf32>
    %34 = vector.multi_reduction <maximumf>, %33, %cst_11 [1] : vector<8x8xf32> to vector<8xf32>
    %35 = vector.shape_cast %34 : vector<8xf32> to vector<8x1xf32>
    %36 = vector.broadcast %35 : vector<8x1xf32> to vector<8x8xf32>
    %37 = arith.subf %33, %36 : vector<8x8xf32>
    %38 = math.exp %37 : vector<8x8xf32>
    %cst_12 = arith.constant dense<0.000000e+00> : vector<8xf32>
    %39 = vector.multi_reduction <add>, %38, %cst_12 [1] : vector<8x8xf32> to vector<8xf32>
    %40 = vector.shape_cast %39 : vector<8xf32> to vector<8x1xf32>
    %41 = tpu.reciprocal %40 {approx = true} : vector<8x1xf32> -> vector<8x1xf32>
    %42 = vector.broadcast %41 : vector<8x1xf32> to vector<8x8xf32>
    %43 = arith.mulf %38, %42 : vector<8x8xf32>
    %44 = arith.truncf %43 : vector<8x8xf32> to vector<8x8xbf16>
    %cst_13 = arith.constant dense<0.000000e+00> : vector<8x8xf32>
    %45 = tpu.matmul %44, %32, %cst_13 {dimension_numbers = #tpu.dot_dimension_numbers<[1], [0], [0], [1], [0, 0, 1, 1], [], []>} : vector<8x8xbf16>, vector<8x8xbf16>, vector<8x8xf32> -> vector<8x8xf32>
    %46 = vector.extract_strided_slice %7 {offsets = [0, 16], sizes = [8, 8], strides = [1, 1]} : vector<8x96xf32> to vector<8x8xf32>
    %47 = arith.truncf %46 : vector<8x8xf32> to vector<8x8xbf16>
    %48 = vector.extract_strided_slice %7 {offsets = [0, 48], sizes = [8, 8], strides = [1, 1]} : vector<8x96xf32> to vector<8x8xf32>
    %49 = arith.truncf %48 : vector<8x8xf32> to vector<8x8xbf16>
    %50 = vector.extract_strided_slice %7 {offsets = [0, 80], sizes = [8, 8], strides = [1, 1]} : vector<8x96xf32> to vector<8x8xf32>
    %51 = arith.truncf %50 : vector<8x8xf32> to vector<8x8xbf16>
    %cst_14 = arith.constant dense<0.000000e+00> : vector<8x8xf32>
    %52 = tpu.matmul %47, %49, %cst_14 {dimension_numbers = #tpu.dot_dimension_numbers<[1], [1], [0], [0], [0, 0, 1, 0], [], []>} : vector<8x8xbf16>, vector<8x8xbf16>, vector<8x8xf32> -> vector<8x8xf32>
    %cst_15 = arith.constant dense<0xFF800000> : vector<8xf32>
    %53 = vector.multi_reduction <maximumf>, %52, %cst_15 [1] : vector<8x8xf32> to vector<8xf32>
    %54 = vector.shape_cast %53 : vector<8xf32> to vector<8x1xf32>
    %55 = vector.broadcast %54 : vector<8x1xf32> to vector<8x8xf32>
    %56 = arith.subf %52, %55 : vector<8x8xf32>
    %57 = math.exp %56 : vector<8x8xf32>
    %cst_16 = arith.constant dense<0.000000e+00> : vector<8xf32>
    %58 = vector.multi_reduction <add>, %57, %cst_16 [1] : vector<8x8xf32> to vector<8xf32>
    %59 = vector.shape_cast %58 : vector<8xf32> to vector<8x1xf32>
    %60 = tpu.reciprocal %59 {approx = true} : vector<8x1xf32> -> vector<8x1xf32>
    %61 = vector.broadcast %60 : vector<8x1xf32> to vector<8x8xf32>
    %62 = arith.mulf %57, %61 : vector<8x8xf32>
    %63 = arith.truncf %62 : vector<8x8xf32> to vector<8x8xbf16>
    %cst_17 = arith.constant dense<0.000000e+00> : vector<8x8xf32>
    %64 = tpu.matmul %63, %51, %cst_17 {dimension_numbers = #tpu.dot_dimension_numbers<[1], [0], [0], [1], [0, 0, 1, 1], [], []>} : vector<8x8xbf16>, vector<8x8xbf16>, vector<8x8xf32> -> vector<8x8xf32>
    %65 = vector.extract_strided_slice %7 {offsets = [0, 24], sizes = [8, 8], strides = [1, 1]} : vector<8x96xf32> to vector<8x8xf32>
    %66 = arith.truncf %65 : vector<8x8xf32> to vector<8x8xbf16>
    %67 = vector.extract_strided_slice %7 {offsets = [0, 56], sizes = [8, 8], strides = [1, 1]} : vector<8x96xf32> to vector<8x8xf32>
    %68 = arith.truncf %67 : vector<8x8xf32> to vector<8x8xbf16>
    %69 = vector.extract_strided_slice %7 {offsets = [0, 88], sizes = [8, 8], strides = [1, 1]} : vector<8x96xf32> to vector<8x8xf32>
    %70 = arith.truncf %69 : vector<8x8xf32> to vector<8x8xbf16>
    %cst_18 = arith.constant dense<0.000000e+00> : vector<8x8xf32>
    %71 = tpu.matmul %66, %68, %cst_18 {dimension_numbers = #tpu.dot_dimension_numbers<[1], [1], [0], [0], [0, 0, 1, 0], [], []>} : vector<8x8xbf16>, vector<8x8xbf16>, vector<8x8xf32> -> vector<8x8xf32>
    %cst_19 = arith.constant dense<0xFF800000> : vector<8xf32>
    %72 = vector.multi_reduction <maximumf>, %71, %cst_19 [1] : vector<8x8xf32> to vector<8xf32>
    %73 = vector.shape_cast %72 : vector<8xf32> to vector<8x1xf32>
    %74 = vector.broadcast %73 : vector<8x1xf32> to vector<8x8xf32>
    %75 = arith.subf %71, %74 : vector<8x8xf32>
    %76 = math.exp %75 : vector<8x8xf32>
    %cst_20 = arith.constant dense<0.000000e+00> : vector<8xf32>
    %77 = vector.multi_reduction <add>, %76, %cst_20 [1] : vector<8x8xf32> to vector<8xf32>
    %78 = vector.shape_cast %77 : vector<8xf32> to vector<8x1xf32>
    %79 = tpu.reciprocal %78 {approx = true} : vector<8x1xf32> -> vector<8x1xf32>
    %80 = vector.broadcast %79 : vector<8x1xf32> to vector<8x8xf32>
    %81 = arith.mulf %76, %80 : vector<8x8xf32>
    %82 = arith.truncf %81 : vector<8x8xf32> to vector<8x8xbf16>
    %cst_21 = arith.constant dense<0.000000e+00> : vector<8x8xf32>
    %83 = tpu.matmul %82, %70, %cst_21 {dimension_numbers = #tpu.dot_dimension_numbers<[1], [0], [0], [1], [0, 0, 1, 1], [], []>} : vector<8x8xbf16>, vector<8x8xbf16>, vector<8x8xf32> -> vector<8x8xf32>
    %84 = tpu.concatenate %26, %45, %64, %83 in 1 : vector<8x8xf32>, vector<8x8xf32>, vector<8x8xf32>, vector<8x8xf32> -> vector<8x32xf32>
    %85 = arith.truncf %84 : vector<8x32xf32> to vector<8x32xbf16>
    %c0_22 = arith.constant 0 : index
    %c0_23 = arith.constant 0 : index
    %86 = vector.load %arg4[%c0_22, %c0_23] : memref<32x32xbf16, #tpu.memory_space<vmem>>, vector<32x32xbf16>
    %cst_24 = arith.constant dense<0.000000e+00> : vector<8x32xf32>
    %87 = tpu.matmul %85, %86, %cst_24 {dimension_numbers = #tpu.dot_dimension_numbers<[1], [0], [0], [1], [0, 0, 1, 1], [], []>} : vector<8x32xbf16>, vector<32x32xbf16>, vector<8x32xf32> -> vector<8x32xf32>
    %c0_25 = arith.constant 0 : index
    %c0_26 = arith.constant 0 : index
    %88 = vector.load %arg5[%c0_25, %c0_26] : memref<1x32xf32, #tpu.memory_space<vmem>>, vector<1x32xf32>
    %89 = vector.broadcast %88 : vector<1x32xf32> to vector<8x32xf32>
    %90 = arith.addf %87, %89 : vector<8x32xf32>
    %91 = arith.addf %1, %90 : vector<8x32xf32>
    %c0_27 = arith.constant 0 : index
    %c0_28 = arith.constant 0 : index
    %92 = vector.load %arg10[%c0_27, %c0_28] : memref<1x32xf32, #tpu.memory_space<vmem>>, vector<1x32xf32>
    %c0_29 = arith.constant 0 : index
    %c0_30 = arith.constant 0 : index
    %93 = vector.load %arg11[%c0_29, %c0_30] : memref<1x32xf32, #tpu.memory_space<vmem>>, vector<1x32xf32>
    %cst_31 = arith.constant dense<0.000000e+00> : vector<8xf32>
    %94 = vector.multi_reduction <add>, %91, %cst_31 [1] : vector<8x32xf32> to vector<8xf32>
    %95 = vector.shape_cast %94 : vector<8xf32> to vector<8x1xf32>
    %cst_32 = arith.constant 3.200000e+01 : f32
    %96 = vector.broadcast %cst_32 : f32 to vector<8x1xf32>
    %97 = arith.divf %95, %96 : vector<8x1xf32>
    %98 = arith.mulf %91, %91 : vector<8x32xf32>
    %cst_33 = arith.constant dense<0.000000e+00> : vector<8xf32>
    %99 = vector.multi_reduction <add>, %98, %cst_33 [1] : vector<8x32xf32> to vector<8xf32>
    %100 = vector.shape_cast %99 : vector<8xf32> to vector<8x1xf32>
    %cst_34 = arith.constant 3.200000e+01 : f32
    %101 = vector.broadcast %cst_34 : f32 to vector<8x1xf32>
    %102 = arith.divf %100, %101 : vector<8x1xf32>
    %103 = arith.mulf %97, %97 : vector<8x1xf32>
    %104 = arith.subf %102, %103 : vector<8x1xf32>
    %105 = vector.broadcast %97 : vector<8x1xf32> to vector<8x32xf32>
    %106 = arith.subf %91, %105 : vector<8x32xf32>
    %cst_35 = arith.constant 9.99999974E-6 : f32
    %107 = vector.broadcast %cst_35 : f32 to vector<8x1xf32>
    %108 = arith.addf %104, %107 : vector<8x1xf32>
    %109 = math.rsqrt %108 : vector<8x1xf32>
    %110 = vector.broadcast %109 : vector<8x1xf32> to vector<8x32xf32>
    %111 = arith.mulf %106, %110 : vector<8x32xf32>
    %112 = vector.broadcast %92 : vector<1x32xf32> to vector<8x32xf32>
    %113 = arith.mulf %111, %112 : vector<8x32xf32>
    %114 = vector.broadcast %93 : vector<1x32xf32> to vector<8x32xf32>
    %115 = arith.addf %113, %114 : vector<8x32xf32>
    %116 = arith.truncf %115 : vector<8x32xf32> to vector<8x32xbf16>
    %c0_36 = arith.constant 0 : index
    %c0_37 = arith.constant 0 : index
    %117 = vector.load %arg6[%c0_36, %c0_37] : memref<32x64xbf16, #tpu.memory_space<vmem>>, vector<32x64xbf16>
    %cst_38 = arith.constant dense<0.000000e+00> : vector<8x64xf32>
    %118 = tpu.matmul %116, %117, %cst_38 {dimension_numbers = #tpu.dot_dimension_numbers<[1], [0], [0], [1], [0, 0, 1, 1], [], []>} : vector<8x32xbf16>, vector<32x64xbf16>, vector<8x64xf32> -> vector<8x64xf32>
    %c0_39 = arith.constant 0 : index
    %c0_40 = arith.constant 0 : index
    %119 = vector.load %arg7[%c0_39, %c0_40] : memref<1x64xf32, #tpu.memory_space<vmem>>, vector<1x64xf32>
    %120 = vector.broadcast %119 : vector<1x64xf32> to vector<8x64xf32>
    %121 = arith.addf %118, %120 : vector<8x64xf32>
    %cst_41 = arith.constant 0.000000e+00 : f32
    %122 = vector.broadcast %cst_41 : f32 to vector<8x64xf32>
    %123 = arith.maximumf %121, %122 : vector<8x64xf32>
    %124 = arith.truncf %123 : vector<8x64xf32> to vector<8x64xbf16>
    %c0_42 = arith.constant 0 : index
    %c0_43 = arith.constant 0 : index
    %125 = vector.load %arg8[%c0_42, %c0_43] : memref<64x32xbf16, #tpu.memory_space<vmem>>, vector<64x32xbf16>
    %cst_44 = arith.constant dense<0.000000e+00> : vector<8x32xf32>
    %126 = tpu.matmul %124, %125, %cst_44 {dimension_numbers = #tpu.dot_dimension_numbers<[1], [0], [0], [1], [0, 0, 1, 1], [], []>} : vector<8x64xbf16>, vector<64x32xbf16>, vector<8x32xf32> -> vector<8x32xf32>
    %c0_45 = arith.constant 0 : index
    %c0_46 = arith.constant 0 : index
    %127 = vector.load %arg9[%c0_45, %c0_46] : memref<1x32xf32, #tpu.memory_space<vmem>>, vector<1x32xf32>
    %128 = vector.broadcast %127 : vector<1x32xf32> to vector<8x32xf32>
    %129 = arith.addf %126, %128 : vector<8x32xf32>
    %130 = arith.addf %115, %129 : vector<8x32xf32>
    %c0_47 = arith.constant 0 : index
    %c0_48 = arith.constant 0 : index
    %131 = vector.load %arg12[%c0_47, %c0_48] : memref<1x32xf32, #tpu.memory_space<vmem>>, vector<1x32xf32>
    %c0_49 = arith.constant 0 : index
    %c0_50 = arith.constant 0 : index
    %132 = vector.load %arg13[%c0_49, %c0_50] : memref<1x32xf32, #tpu.memory_space<vmem>>, vector<1x32xf32>
    %cst_51 = arith.constant dense<0.000000e+00> : vector<8xf32>
    %133 = vector.multi_reduction <add>, %130, %cst_51 [1] : vector<8x32xf32> to vector<8xf32>
    %134 = vector.shape_cast %133 : vector<8xf32> to vector<8x1xf32>
    %cst_52 = arith.constant 3.200000e+01 : f32
    %135 = vector.broadcast %cst_52 : f32 to vector<8x1xf32>
    %136 = arith.divf %134, %135 : vector<8x1xf32>
    %137 = arith.mulf %130, %130 : vector<8x32xf32>
    %cst_53 = arith.constant dense<0.000000e+00> : vector<8xf32>
    %138 = vector.multi_reduction <add>, %137, %cst_53 [1] : vector<8x32xf32> to vector<8xf32>
    %139 = vector.shape_cast %138 : vector<8xf32> to vector<8x1xf32>
    %cst_54 = arith.constant 3.200000e+01 : f32
    %140 = vector.broadcast %cst_54 : f32 to vector<8x1xf32>
    %141 = arith.divf %139, %140 : vector<8x1xf32>
    %142 = arith.mulf %136, %136 : vector<8x1xf32>
    %143 = arith.subf %141, %142 : vector<8x1xf32>
    %144 = vector.broadcast %136 : vector<8x1xf32> to vector<8x32xf32>
    %145 = arith.subf %130, %144 : vector<8x32xf32>
    %cst_55 = arith.constant 9.99999974E-6 : f32
    %146 = vector.broadcast %cst_55 : f32 to vector<8x1xf32>
    %147 = arith.addf %143, %146 : vector<8x1xf32>
    %148 = math.rsqrt %147 : vector<8x1xf32>
    %149 = vector.broadcast %148 : vector<8x1xf32> to vector<8x32xf32>
    %150 = arith.mulf %145, %149 : vector<8x32xf32>
    %151 = vector.broadcast %131 : vector<1x32xf32> to vector<8x32xf32>
    %152 = arith.mulf %150, %151 : vector<8x32xf32>
    %153 = vector.broadcast %132 : vector<1x32xf32> to vector<8x32xf32>
    %154 = arith.addf %152, %153 : vector<8x32xf32>
    %c0_56 = arith.constant 0 : index
    %c0_57 = arith.constant 0 : index
    %c0_58 = arith.constant 0 : index
    %155 = vector.load %arg14[%c0_56, %c0_57, %c0_58] : memref<1x8x32xf32, #tpu.memory_space<vmem>>, vector<1x8x32xf32>
    %156 = vector.shape_cast %155 : vector<1x8x32xf32> to vector<8x32xf32>
    %157 = vector.shape_cast %154 : vector<8x32xf32> to vector<1x8x32xf32>
    tpu.vector_store %arg14[%c0_56, %c0_57, %c0_58], %157 {strides = array<i32>} : memref<1x8x32xf32, #tpu.memory_space<vmem>>, vector<1x8x32xf32>,
    return
  }
  func.func @transform_0(%arg0: i32) -> (i32, i32, i32) {
    %c0_i32 = arith.constant 0 : i32
    %c0_i32_0 = arith.constant 0 : i32
    %c0_i32_1 = arith.constant 0 : i32
    return %arg0, %c0_i32, %c0_i32_0 : i32, i32, i32
  }
  func.func @transform_1(%arg0: i32) -> (i32, i32) {
    %c0_i32 = arith.constant 0 : i32
    %c0_i32_0 = arith.constant 0 : i32
    %c0_i32_1 = arith.constant 0 : i32
    return %c0_i32, %c0_i32_0 : i32, i32
  }
  func.func @transform_2(%arg0: i32) -> (i32, i32) {
    %c0_i32 = arith.constant 0 : i32
    %c0_i32_0 = arith.constant 0 : i32
    %c0_i32_1 = arith.constant 0 : i32
    return %c0_i32, %c0_i32_0 : i32, i32
  }
  func.func @transform_3(%arg0: i32) -> (i32, i32) {
    %c0_i32 = arith.constant 0 : i32
    %c0_i32_0 = arith.constant 0 : i32
    %c0_i32_1 = arith.constant 0 : i32
    return %c0_i32, %c0_i32_0 : i32, i32
  }
  func.func @transform_4(%arg0: i32) -> (i32, i32) {
    %c0_i32 = arith.constant 0 : i32
    %c0_i32_0 = arith.constant 0 : i32
    %c0_i32_1 = arith.constant 0 : i32
    return %c0_i32, %c0_i32_0 : i32, i32
  }
  func.func @transform_5(%arg0: i32) -> (i32, i32) {
    %c0_i32 = arith.constant 0 : i32
    %c0_i32_0 = arith.constant 0 : i32
    %c0_i32_1 = arith.constant 0 : i32
    return %c0_i32, %c0_i32_0 : i32, i32
  }
  func.func @transform_6(%arg0: i32) -> (i32, i32) {
    %c0_i32 = arith.constant 0 : i32
    %c0_i32_0 = arith.constant 0 : i32
    %c0_i32_1 = arith.constant 0 : i32
    return %c0_i32, %c0_i32_0 : i32, i32
  }
  func.func @transform_7(%arg0: i32) -> (i32, i32) {
    %c0_i32 = arith.constant 0 : i32
    %c0_i32_0 = arith.constant 0 : i32
    %c0_i32_1 = arith.constant 0 : i32
    return %c0_i32, %c0_i32_0 : i32, i32
  }
  func.func @transform_8(%arg0: i32) -> (i32, i32) {
    %c0_i32 = arith.constant 0 : i32
    %c0_i32_0 = arith.constant 0 : i32
    %c0_i32_1 = arith.constant 0 : i32
    return %c0_i32, %c0_i32_0 : i32, i32
  }
  func.func @transform_9(%arg0: i32) -> (i32, i32) {
    %c0_i32 = arith.constant 0 : i32
    %c0_i32_0 = arith.constant 0 : i32
    %c0_i32_1 = arith.constant 0 : i32
    return %c0_i32, %c0_i32_0 : i32, i32
  }
  func.func @transform_10(%arg0: i32) -> (i32, i32) {
    %c0_i32 = arith.constant 0 : i32
    %c0_i32_0 = arith.constant 0 : i32
    %c0_i32_1 = arith.constant 0 : i32
    return %c0_i32, %c0_i32_0 : i32, i32
  }
  func.func @transform_11(%arg0: i32) -> (i32, i32) {
    %c0_i32 = arith.constant 0 : i32
    %c0_i32_0 = arith.constant 0 : i32
    %c0_i32_1 = arith.constant 0 : i32
    return %c0_i32, %c0_i32_0 : i32, i32
  }
  func.func @transform_12(%arg0: i32) -> (i32, i32) {
    %c0_i32 = arith.constant 0 : i32
    %c0_i32_0 = arith.constant 0 : i32
    %c0_i32_1 = arith.constant 0 : i32
    return %c0_i32, %c0_i32_0 : i32, i32
  }
  func.func @transform_13(%arg0: i32) -> (i32, i32, i32) {
    %c0_i32 = arith.constant 0 : i32
    %c0_i32_0 = arith.constant 0 : i32
    %c0_i32_1 = arith.constant 0 : i32
    return %arg0, %c0_i32, %c0_i32_0 : i32, i32, i32
  }
}

</mosaic_0001>

<llo_original>
// kernel: mul.9
$region0: #{mul.9}
  #allocation2 [shape = 's32[1]{0}', space=sflag, size = 0x4, scoped, tag = 'scoped memory for mul.9']
  %s0 = inlined_call_operand.hbm [shape: f32[1,96], index: 0, kind: input, shape index: {}]
  %s1 = inlined_call_operand.vmem [shape: f32[1,96], index: 1, kind: input, shape index: {}]
  %s2 = inlined_call_operand.vmem [shape: f32[1,96], index: 2, kind: output, shape index: {}]
  $region1: #{mul.9} parent=0
    #allocation0 [shape = 'u8[512]{0}', space=vmem, size = 0x400, scoped, tag = 'operand span for operand 0']
    #allocation1 [shape = 's32[1]{0}', space=sflag, size = 0x4, scoped, tag = 'scoped memory for mul.9']
    %3 = vsyncpa [#allocation1], 0
    %s5 = ssub.s32 16, 16
    %6 = vsyncadd [#allocation1], %s5
    %s8 = sshll.u32 [#allocation0], 4
    %s9 = int_to_ptr.vmem [resolvable:$true] %s8
    %11 = dma.hbm_to_vmem [thread:$0]  %s0, 16, %s9, [#allocation1]
    %12 = dma.done [#allocation1], 16
    %v13 = vld [vmem:[#allocation0] sm:$0x1]
    %v14 = vld [vmem:[%s1] sm:$0x1]
    %15 = xla_tuple %v13, %v14
    %16 = xla_tuple %15
    %v17 = vmul.f32 %v13, %v14
    %18 = xla_tuple %v17
    %19 = vst [vmem:[%s2] sm:$0x1] %v17
    %20 = vsyncpa [#allocation1], 1

// kernel: transformer_encoder_layer.1
$region0: #{transformer_encoder_layer.1}
  #allocation0 [shape = 'u32[]', space=smem, size = 0x4, offset = 0x4, fixed_abs, tag = 'smem constant byte address 0x4 - core index']
  #allocation1 [shape = 'u32[144,128]{1,0:T(1,128)}', space=vmem, size = 0x12000, scoped, tag = 'internal scratch']
  %s0 = inlined_call_operand.vmem [shape: f32[2,8,32], index: 0, kind: input, shape index: {}]
  %s1 = inlined_call_operand.vmem [shape: bf16[32,96], index: 1, kind: input, shape index: {}]
  %s2 = inlined_call_operand.vmem [shape: f32[1,96], index: 2, kind: input, shape index: {}]
  %s3 = inlined_call_operand.vmem [shape: bf16[32,32], index: 3, kind: input, shape index: {}]
  %s4 = inlined_call_operand.vmem [shape: f32[1,32], index: 4, kind: input, shape index: {}]
  %s5 = inlined_call_operand.vmem [shape: bf16[32,64], index: 5, kind: input, shape index: {}]
  %s6 = inlined_call_operand.vmem [shape: f32[1,64], index: 6, kind: input, shape index: {}]
  %s7 = inlined_call_operand.vmem [shape: bf16[64,32], index: 7, kind: input, shape index: {}]
  %s8 = inlined_call_operand.vmem [shape: f32[1,32], index: 8, kind: input, shape index: {}]
  %s9 = inlined_call_operand.vmem [shape: f32[1,32], index: 9, kind: input, shape index: {}]
  %s10 = inlined_call_operand.vmem [shape: f32[1,32], index: 10, kind: input, shape index: {}]
  %s11 = inlined_call_operand.vmem [shape: f32[1,32], index: 11, kind: input, shape index: {}]
  %s12 = inlined_call_operand.vmem [shape: f32[1,32], index: 12, kind: input, shape index: {}]
  %s13 = inlined_call_operand.vmem [shape: f32[2,8,32], index: 13, kind: output, shape index: {}]
  %s14 = sld [smem:[#allocation0]]
  $region85: #{transformer_encoder_layer.1} parent=0
    _
  %s16 = ssub.s32 1, %s14
  %s17 = scalar_select 0, %s16, %s14
  loop: start=0, step=1, limit=4
  $region2: #{transformer_encoder_layer.1} parent=0 // loop_pre_header
    _
  $region3: #{transformer_encoder_layer.1} parent=0 // loop_header
    %s19 = sphi 0, %s23
    %p20 = scmp.ge.s32.totalorder %s19, 4
    %s29 = sphi 0, %s31
    %s32 = sphi 0, %s29
    %s33 = sphi 0, %s32
    %s49 = sphi 0, %s33
    %s53 = sphi 0, %s53
    %s55 = sphi 0, %s53
    %s56 = sphi 0, %s55
    %s70 = sphi 0, %s56
    %s74 = sphi 0, %s74
    %s76 = sphi 0, %s74
    %s77 = sphi 0, %s76
    %s91 = sphi 0, %s77
    %s95 = sphi 0, %s95
    %s97 = sphi 0, %s95
    %s98 = sphi 0, %s97
    %s112 = sphi 0, %s98
    %s116 = sphi 0, %s116
    %s118 = sphi 0, %s116
    %s119 = sphi 0, %s118
    %s133 = sphi 0, %s119
    %s137 = sphi 0, %s137
    %s139 = sphi 0, %s137
    %s140 = sphi 0, %s139
    %s154 = sphi 0, %s140
    %s158 = sphi 0, %s158
    %s160 = sphi 0, %s158
    %s161 = sphi 0, %s160
    %s175 = sphi 0, %s161
    %s179 = sphi 0, %s179
    %s181 = sphi 0, %s179
    %s182 = sphi 0, %s181
    %s196 = sphi 0, %s182
    %s200 = sphi 0, %s200
    %s202 = sphi 0, %s200
    %s203 = sphi 0, %s202
    %s217 = sphi 0, %s203
    %s221 = sphi 0, %s221
    %s223 = sphi 0, %s221
    %s224 = sphi 0, %s223
    %s238 = sphi 0, %s224
    %s242 = sphi 0, %s242
    %s244 = sphi 0, %s242
    %s245 = sphi 0, %s244
    %s259 = sphi 0, %s245
    %s263 = sphi 0, %s263
    %s265 = sphi 0, %s263
    %s266 = sphi 0, %s265
    %s280 = sphi 0, %s266
    %s284 = sphi 0, %s284
    %s286 = sphi 0, %s284
    %s287 = sphi 0, %s286
    %s301 = sphi 0, %s287
    %s307 = sphi 0, %s309
    %s310 = sphi 0, %s307
    %s311 = sphi 0, %s310
    %s327 = sphi 0, %s311
  $region4: #{transformer_encoder_layer.1} parent=0 // loop_header_branch
    %22 = sbr.rel (%p20) target = $region8
  $region5: #{transformer_encoder_layer.1} parent=0 // loop_body
    %s24 = ssub.s32 %s19, 1
    %s25 = ssub.s32 %s19, 2
    %s26 = sadd.s32 %s19, 1
    %s27 = ssub.s32 %s19, %s26
    %p28 = scmp.eq.s32.totalorder %s27, 0
    %s30 = sadd.s32 %s29, 1
    %s31 = scalar_select %p28, %s29, %s30
    %p34 = pneg %p28
    %p35 = scmp.eq.s32.totalorder %s19, 1
    %p36 = por %p34, %p35
    %p37 = scmp.ne.s32.totalorder %s29, %s32
    %p38 = scmp.eq.s32.totalorder %s19, 0
    %p39 = por %p37, %p38
    %p40 = scmp.ne.s32.totalorder %s29, %s32
    %p41 = scmp.eq.s32.totalorder %s24, 1
    %p42 = por %p40, %p41
    %p43 = scmp.ne.s32.totalorder %s32, %s33
    %p44 = scmp.eq.s32.totalorder %s24, 0
    %p45 = por %p43, %p44
    %p46 = scmp.ne.s32.totalorder %s32, %s33
    %p47 = scmp.eq.s32.totalorder %s25, 1
    %p48 = por %p46, %p47
    %p50 = scmp.ne.s32.totalorder %s33, %s49
    %p51 = scmp.eq.s32.totalorder %s25, 0
    %p52 = por %p50, %p51
    %s54 = sadd.s32 %s53, 1
    %p57 = scmp.eq.s32.totalorder %s19, 1
    %p58 = scmp.ne.s32.totalorder %s53, %s55
    %p59 = scmp.eq.s32.totalorder %s19, 0
    %p60 = por %p58, %p59
    %p61 = scmp.ne.s32.totalorder %s53, %s55
    %p62 = scmp.eq.s32.totalorder %s24, 1
    %p63 = por %p61, %p62
    %p64 = scmp.ne.s32.totalorder %s55, %s56
    %p65 = scmp.eq.s32.totalorder %s24, 0
    %p66 = por %p64, %p65
    %p67 = scmp.ne.s32.totalorder %s55, %s56
    %p68 = scmp.eq.s32.totalorder %s25, 1
    %p69 = por %p67, %p68
    %p71 = scmp.ne.s32.totalorder %s56, %s70
    %p72 = scmp.eq.s32.totalorder %s25, 0
    %p73 = por %p71, %p72
    %s75 = sadd.s32 %s74, 1
    %p78 = scmp.eq.s32.totalorder %s19, 1
    %p79 = scmp.ne.s32.totalorder %s74, %s76
    %p80 = scmp.eq.s32.totalorder %s19, 0
    %p81 = por %p79, %p80
    %p82 = scmp.ne.s32.totalorder %s74, %s76
    %p83 = scmp.eq.s32.totalorder %s24, 1
    %p84 = por %p82, %p83
    %p85 = scmp.ne.s32.totalorder %s76, %s77
    %p86 = scmp.eq.s32.totalorder %s24, 0
    %p87 = por %p85, %p86
    %p88 = scmp.ne.s32.totalorder %s76, %s77
    %p89 = scmp.eq.s32.totalorder %s25, 1
    %p90 = por %p88, %p89
    %p92 = scmp.ne.s32.totalorder %s77, %s91
    %p93 = scmp.eq.s32.totalorder %s25, 0
    %p94 = por %p92, %p93
    %s96 = sadd.s32 %s95, 1
    %p99 = scmp.eq.s32.totalorder %s19, 1
    %p100 = scmp.ne.s32.totalorder %s95, %s97
    %p101 = scmp.eq.s32.totalorder %s19, 0
    %p102 = por %p100, %p101
    %p103 = scmp.ne.s32.totalorder %s95, %s97
    %p104 = scmp.eq.s32.totalorder %s24, 1
    %p105 = por %p103, %p104
    %p106 = scmp.ne.s32.totalorder %s97, %s98
    %p107 = scmp.eq.s32.totalorder %s24, 0
    %p108 = por %p106, %p107
    %p109 = scmp.ne.s32.totalorder %s97, %s98
    %p110 = scmp.eq.s32.totalorder %s25, 1
    %p111 = por %p109, %p110
    %p113 = scmp.ne.s32.totalorder %s98, %s112
    %p114 = scmp.eq.s32.totalorder %s25, 0
    %p115 = por %p113, %p114
    %s117 = sadd.s32 %s116, 1
    %p120 = scmp.eq.s32.totalorder %s19, 1
    %p121 = scmp.ne.s32.totalorder %s116, %s118
    %p122 = scmp.eq.s32.totalorder %s19, 0
    %p123 = por %p121, %p122
    %p124 = scmp.ne.s32.totalorder %s116, %s118
    %p125 = scmp.eq.s32.totalorder %s24, 1
    %p126 = por %p124, %p125
    %p127 = scmp.ne.s32.totalorder %s118, %s119
    %p128 = scmp.eq.s32.totalorder %s24, 0
    %p129 = por %p127, %p128
    %p130 = scmp.ne.s32.totalorder %s118, %s119
    %p131 = scmp.eq.s32.totalorder %s25, 1
    %p132 = por %p130, %p131
    %p134 = scmp.ne.s32.totalorder %s119, %s133
    %p135 = scmp.eq.s32.totalorder %s25, 0
    %p136 = por %p134, %p135
    %s138 = sadd.s32 %s137, 1
    %p141 = scmp.eq.s32.totalorder %s19, 1
    %p142 = scmp.ne.s32.totalorder %s137, %s139
    %p143 = scmp.eq.s32.totalorder %s19, 0
    %p144 = por %p142, %p143
    %p145 = scmp.ne.s32.totalorder %s137, %s139
    %p146 = scmp.eq.s32.totalorder %s24, 1
    %p147 = por %p145, %p146
    %p148 = scmp.ne.s32.totalorder %s139, %s140
    %p149 = scmp.eq.s32.totalorder %s24, 0
    %p150 = por %p148, %p149
    %p151 = scmp.ne.s32.totalorder %s139, %s140
    %p152 = scmp.eq.s32.totalorder %s25, 1
    %p153 = por %p151, %p152
    %p155 = scmp.ne.s32.totalorder %s140, %s154
    %p156 = scmp.eq.s32.totalorder %s25, 0
    %p157 = por %p155, %p156
    %s159 = sadd.s32 %s158, 1
    %p162 = scmp.eq.s32.totalorder %s19, 1
    %p163 = scmp.ne.s32.totalorder %s158, %s160
    %p164 = scmp.eq.s32.totalorder %s19, 0
    %p165 = por %p163, %p164
    %p166 = scmp.ne.s32.totalorder %s158, %s160
    %p167 = scmp.eq.s32.totalorder %s24, 1
    %p168 = por %p166, %p167
    %p169 = scmp.ne.s32.totalorder %s160, %s161
    %p170 = scmp.eq.s32.totalorder %s24, 0
    %p171 = por %p169, %p170
    %p172 = scmp.ne.s32.totalorder %s160, %s161
    %p173 = scmp.eq.s32.totalorder %s25, 1
    %p174 = por %p172, %p173
    %p176 = scmp.ne.s32.totalorder %s161, %s175
    %p177 = scmp.eq.s32.totalorder %s25, 0
    %p178 = por %p176, %p177
    %s180 = sadd.s32 %s179, 1
    %p183 = scmp.eq.s32.totalorder %s19, 1
    %p184 = scmp.ne.s32.totalorder %s179, %s181
    %p185 = scmp.eq.s32.totalorder %s19, 0
    %p186 = por %p184, %p185
    %p187 = scmp.ne.s32.totalorder %s179, %s181
    %p188 = scmp.eq.s32.totalorder %s24, 1
    %p189 = por %p187, %p188
    %p190 = scmp.ne.s32.totalorder %s181, %s182
    %p191 = scmp.eq.s32.totalorder %s24, 0
    %p192 = por %p190, %p191
    %p193 = scmp.ne.s32.totalorder %s181, %s182
    %p194 = scmp.eq.s32.totalorder %s25, 1
    %p195 = por %p193, %p194
    %p197 = scmp.ne.s32.totalorder %s182, %s196
    %p198 = scmp.eq.s32.totalorder %s25, 0
    %p199 = por %p197, %p198
    %s201 = sadd.s32 %s200, 1
    %p204 = scmp.eq.s32.totalorder %s19, 1
    %p205 = scmp.ne.s32.totalorder %s200, %s202
    %p206 = scmp.eq.s32.totalorder %s19, 0
    %p207 = por %p205, %p206
    %p208 = scmp.ne.s32.totalorder %s200, %s202
    %p209 = scmp.eq.s32.totalorder %s24, 1
    %p210 = por %p208, %p209
    %p211 = scmp.ne.s32.totalorder %s202, %s203
    %p212 = scmp.eq.s32.totalorder %s24, 0
    %p213 = por %p211, %p212
    %p214 = scmp.ne.s32.totalorder %s202, %s203
    %p215 = scmp.eq.s32.totalorder %s25, 1
    %p216 = por %p214, %p215
    %p218 = scmp.ne.s32.totalorder %s203, %s217
    %p219 = scmp.eq.s32.totalorder %s25, 0
    %p220 = por %p218, %p219
    %s222 = sadd.s32 %s221, 1
    %p225 = scmp.eq.s32.totalorder %s19, 1
    %p226 = scmp.ne.s32.totalorder %s221, %s223
    %p227 = scmp.eq.s32.totalorder %s19, 0
    %p228 = por %p226, %p227
    %p229 = scmp.ne.s32.totalorder %s221, %s223
    %p230 = scmp.eq.s32.totalorder %s24, 1
    %p231 = por %p229, %p230
    %p232 = scmp.ne.s32.totalorder %s223, %s224
    %p233 = scmp.eq.s32.totalorder %s24, 0
    %p234 = por %p232, %p233
    %p235 = scmp.ne.s32.totalorder %s223, %s224
    %p236 = scmp.eq.s32.totalorder %s25, 1
    %p237 = por %p235, %p236
    %p239 = scmp.ne.s32.totalorder %s224, %s238
    %p240 = scmp.eq.s32.totalorder %s25, 0
    %p241 = por %p239, %p240
    %s243 = sadd.s32 %s242, 1
    %p246 = scmp.eq.s32.totalorder %s19, 1
    %p247 = scmp.ne.s32.totalorder %s242, %s244
    %p248 = scmp.eq.s32.totalorder %s19, 0
    %p249 = por %p247, %p248
    %p250 = scmp.ne.s32.totalorder %s242, %s244
    %p251 = scmp.eq.s32.totalorder %s24, 1
    %p252 = por %p250, %p251
    %p253 = scmp.ne.s32.totalorder %s244, %s245
    %p254 = scmp.eq.s32.totalorder %s24, 0
    %p255 = por %p253, %p254
    %p256 = scmp.ne.s32.totalorder %s244, %s245
    %p257 = scmp.eq.s32.totalorder %s25, 1
    %p258 = por %p256, %p257
    %p260 = scmp.ne.s32.totalorder %s245, %s259
    %p261 = scmp.eq.s32.totalorder %s25, 0
    %p262 = por %p260, %p261
    %s264 = sadd.s32 %s263, 1
    %p267 = scmp.eq.s32.totalorder %s19, 1
    %p268 = scmp.ne.s32.totalorder %s263, %s265
    %p269 = scmp.eq.s32.totalorder %s19, 0
    %p270 = por %p268, %p269
    %p271 = scmp.ne.s32.totalorder %s263, %s265
    %p272 = scmp.eq.s32.totalorder %s24, 1
    %p273 = por %p271, %p272
    %p274 = scmp.ne.s32.totalorder %s265, %s266
    %p275 = scmp.eq.s32.totalorder %s24, 0
    %p276 = por %p274, %p275
    %p277 = scmp.ne.s32.totalorder %s265, %s266
    %p278 = scmp.eq.s32.totalorder %s25, 1
    %p279 = por %p277, %p278
    %p281 = scmp.ne.s32.totalorder %s266, %s280
    %p282 = scmp.eq.s32.totalorder %s25, 0
    %p283 = por %p281, %p282
    %s285 = sadd.s32 %s284, 1
    %p288 = scmp.eq.s32.totalorder %s19, 1
    %p289 = scmp.ne.s32.totalorder %s284, %s286
    %p290 = scmp.eq.s32.totalorder %s19, 0
    %p291 = por %p289, %p290
    %p292 = scmp.ne.s32.totalorder %s284, %s286
    %p293 = scmp.eq.s32.totalorder %s24, 1
    %p294 = por %p292, %p293
    %p295 = scmp.ne.s32.totalorder %s286, %s287
    %p296 = scmp.eq.s32.totalorder %s24, 0
    %p297 = por %p295, %p296
    %p298 = scmp.ne.s32.totalorder %s286, %s287
    %p299 = scmp.eq.s32.totalorder %s25, 1
    %p300 = por %p298, %p299
    %p302 = scmp.ne.s32.totalorder %s287, %s301
    %p303 = scmp.eq.s32.totalorder %s25, 0
    %p304 = por %p302, %p303
    %s305 = ssub.s32 %s19, %s26
    %p306 = scmp.eq.s32.totalorder %s305, 0
    %s308 = sadd.s32 %s307, 1
    %s309 = scalar_select %p306, %s307, %s308
    %p312 = pneg %p306
    %p313 = scmp.eq.s32.totalorder %s19, 1
    %p314 = por %p312, %p313
    %p315 = scmp.ne.s32.totalorder %s307, %s310
    %p316 = scmp.eq.s32.totalorder %s19, 0
    %p317 = por %p315, %p316
    %p318 = scmp.ne.s32.totalorder %s307, %s310
    %p319 = scmp.eq.s32.totalorder %s24, 1
    %p320 = por %p318, %p319
    %p321 = scmp.ne.s32.totalorder %s310, %s311
    %p322 = scmp.eq.s32.totalorder %s24, 0
    %p323 = por %p321, %p322
    %p324 = scmp.ne.s32.totalorder %s310, %s311
    %p325 = scmp.eq.s32.totalorder %s25, 1
    %p326 = por %p324, %p325
    %p328 = scmp.ne.s32.totalorder %s311, %s327
    %p329 = scmp.eq.s32.totalorder %s25, 0
    %p330 = por %p328, %p329
    %p331 = scmp.le.s32.totalorder 1, %s19
    %p332 = scmp.lt.s32.totalorder %s19, 3
    %p333 = pnand %p331, %p332
    %p334 = pneg %p333
    // Predicated region
    $region9: #{transformer_encoder_layer.1} parent=5 // pred_check
      _
    $region10: #{transformer_encoder_layer.1} parent=5 // pred_check_branch
      %336 = sbr.rel (%p333) target = $region12
    $region11: #{transformer_encoder_layer.1} parent=5 // pred_region
      %s337 = ssub.s32 %s19, 1
      // Predicated region
      $region13: #{transformer_encoder_layer.1} parent=11 // pred_check
        %p338 = pneg %p66
      $region14: #{transformer_encoder_layer.1} parent=11 // pred_check_branch
        %340 = sbr.rel (%p338) target = $region16
      $region15: #{transformer_encoder_layer.1} parent=11 // pred_region
        _
      $region16: #{transformer_encoder_layer.1} parent=11 // pred_fallthru
        _
      // Predicated region
      $region17: #{transformer_encoder_layer.1} parent=11 // pred_check
        %p341 = pneg %p87
      $region18: #{transformer_encoder_layer.1} parent=11 // pred_check_branch
        %343 = sbr.rel (%p341) target = $region20
      $region19: #{transformer_encoder_layer.1} parent=11 // pred_region
        _
      $region20: #{transformer_encoder_layer.1} parent=11 // pred_fallthru
        _
      // Predicated region
      $region21: #{transformer_encoder_layer.1} parent=11 // pred_check
        %p344 = pneg %p108
      $region22: #{transformer_encoder_layer.1} parent=11 // pred_check_branch
        %346 = sbr.rel (%p344) target = $region24
      $region23: #{transformer_encoder_layer.1} parent=11 // pred_region
        _
      $region24: #{transformer_encoder_layer.1} parent=11 // pred_fallthru
        _
      // Predicated region
      $region25: #{transformer_encoder_layer.1} parent=11 // pred_check
        %p347 = pneg %p129
      $region26: #{transformer_encoder_layer.1} parent=11 // pred_check_branch
        %349 = sbr.rel (%p347) target = $region28
      $region27: #{transformer_encoder_layer.1} parent=11 // pred_region
        _
      $region28: #{transformer_encoder_layer.1} parent=11 // pred_fallthru
        _
      // Predicated region
      $region29: #{transformer_encoder_layer.1} parent=11 // pred_check
        %p350 = pneg %p150
      $region30: #{transformer_encoder_layer.1} parent=11 // pred_check_branch
        %352 = sbr.rel (%p350) target = $region32
      $region31: #{transformer_encoder_layer.1} parent=11 // pred_region
        _
      $region32: #{transformer_encoder_layer.1} parent=11 // pred_fallthru
        _
      // Predicated region
      $region33: #{transformer_encoder_layer.1} parent=11 // pred_check
        %p353 = pneg %p171
      $region34: #{transformer_encoder_layer.1} parent=11 // pred_check_branch
        %355 = sbr.rel (%p353) target = $region36
      $region35: #{transformer_encoder_layer.1} parent=11 // pred_region
        _
      $region36: #{transformer_encoder_layer.1} parent=11 // pred_fallthru
        _
      // Predicated region
      $region37: #{transformer_encoder_layer.1} parent=11 // pred_check
        %p356 = pneg %p192
      $region38: #{transformer_encoder_layer.1} parent=11 // pred_check_branch
        %358 = sbr.rel (%p356) target = $region40
      $region39: #{transformer_encoder_layer.1} parent=11 // pred_region
        _
      $region40: #{transformer_encoder_layer.1} parent=11 // pred_fallthru
        _
      // Predicated region
      $region41: #{transformer_encoder_layer.1} parent=11 // pred_check
        %p359 = pneg %p213
      $region42: #{transformer_encoder_layer.1} parent=11 // pred_check_branch
        %361 = sbr.rel (%p359) target = $region44
      $region43: #{transformer_encoder_layer.1} parent=11 // pred_region
        _
      $region44: #{transformer_encoder_layer.1} parent=11 // pred_fallthru
        _
      // Predicated region
      $region45: #{transformer_encoder_layer.1} parent=11 // pred_check
        %p362 = pneg %p234
      $region46: #{transformer_encoder_layer.1} parent=11 // pred_check_branch
        %364 = sbr.rel (%p362) target = $region48
      $region47: #{transformer_encoder_layer.1} parent=11 // pred_region
        _
      $region48: #{transformer_encoder_layer.1} parent=11 // pred_fallthru
        _
      // Predicated region
      $region49: #{transformer_encoder_layer.1} parent=11 // pred_check
        %p365 = pneg %p255
      $region50: #{transformer_encoder_layer.1} parent=11 // pred_check_branch
        %367 = sbr.rel (%p365) target = $region52
      $region51: #{transformer_encoder_layer.1} parent=11 // pred_region
        _
      $region52: #{transformer_encoder_layer.1} parent=11 // pred_fallthru
        _
      // Predicated region
      $region53: #{transformer_encoder_layer.1} parent=11 // pred_check
        %p368 = pneg %p276
      $region54: #{transformer_encoder_layer.1} parent=11 // pred_check_branch
        %370 = sbr.rel (%p368) target = $region56
      $region55: #{transformer_encoder_layer.1} parent=11 // pred_region
        _
      $region56: #{transformer_encoder_layer.1} parent=11 // pred_fallthru
        _
      // Predicated region
      $region57: #{transformer_encoder_layer.1} parent=11 // pred_check
        %p371 = pneg %p297
      $region58: #{transformer_encoder_layer.1} parent=11 // pred_check_branch
        %373 = sbr.rel (%p371) target = $region60
      $region59: #{transformer_encoder_layer.1} parent=11 // pred_region
        _
      $region60: #{transformer_encoder_layer.1} parent=11 // pred_fallthru
        _
    $region12: #{transformer_encoder_layer.1} parent=5 // pred_fallthru
      _
    %p374 = scmp.lt.s32.totalorder %s19, 2
    // Predicated region
    $region61: #{transformer_encoder_layer.1} parent=5 // pred_check
      %p375 = pneg %p374
    $region62: #{transformer_encoder_layer.1} parent=5 // pred_check_branch
      %377 = sbr.rel (%p375) target = $region64
    $region63: #{transformer_encoder_layer.1} parent=5 // pred_region
      // Predicated region
      $region65: #{transformer_encoder_layer.1} parent=63 // pred_check
        %p378 = pneg %p39
      $region66: #{transformer_encoder_layer.1} parent=63 // pred_check_branch
        %380 = sbr.rel (%p378) target = $region68
      $region67: #{transformer_encoder_layer.1} parent=63 // pred_region
        %p381 = scmp.lt.s32.totalorder %s19, 1
        %s382 = scalar_select %p381, %s19, 1
        %s383 = smul.addr %s382, 8
        %s384 = scalar_lea.vmem %s0, %s383
      $region68: #{transformer_encoder_layer.1} parent=63 // pred_fallthru
        _
    $region64: #{transformer_encoder_layer.1} parent=5 // pred_fallthru
      _
    %p385 = scmp.le.s32.totalorder 1, %s19
    %p386 = scmp.lt.s32.totalorder %s19, 3
    %p387 = pnand %p385, %p386
    %p388 = pneg %p387
    // Predicated region
    $region69: #{transformer_encoder_layer.1} parent=5 // pred_check
      _
    $region70: #{transformer_encoder_layer.1} parent=5 // pred_check_branch
      %390 = sbr.rel (%p387) target = $region72
    $region71: #{transformer_encoder_layer.1} parent=5 // pred_region
      %s391 = ssub.s32 %s19, 1
      %p392 = scmp.lt.s32.totalorder %s24, 1
      %s393 = scalar_select %p392, %s24, 1
      %s394 = smul.addr %s393, 8
      %s395 = scalar_lea.vmem %s0, %s394
      %p396 = pneg %p45
      %p397 = pneg %p42
      %p398 = pneg %p66
      %p399 = pneg %p63
      %p400 = pneg %p87
      %p401 = pneg %p84
      %p402 = pneg %p108
      %p403 = pneg %p105
      %p404 = pneg %p129
      %p405 = pneg %p126
      %p406 = pneg %p150
      %p407 = pneg %p147
      %p408 = pneg %p171
      %p409 = pneg %p168
      %p410 = pneg %p192
      %p411 = pneg %p189
      %p412 = pneg %p213
      %p413 = pneg %p210
      %p414 = pneg %p234
      %p415 = pneg %p231
      %p416 = pneg %p255
      %p417 = pneg %p252
      %p418 = pneg %p276
      %p419 = pneg %p273
      %p420 = pneg %p297
      %p421 = pneg %p294
      %p422 = pneg %p323
      %p423 = pneg %p320
      %p424 = scmp.lt.s32.totalorder %s24, 1
      %s425 = scalar_select %p424, %s24, 1
      %s426 = smul.addr %s425, 8
      %s427 = scalar_lea.vmem %s13, %s426
      %p428 = scmp.lt.s32.totalorder %s24, 1
      %s429 = scalar_select %p428, %s24, 1
      %s430 = smul.addr %s429, 8
      %s431 = scalar_lea.vmem %s0, %s430
      %p432 = scmp.lt.s32.totalorder %s24, 1
      %s433 = scalar_select %p432, %s24, 1
      %s434 = smul.addr %s433, 8
      %s435 = scalar_lea.vmem %s13, %s434
      %v437 = vld [vmem:[%s431] sm:$0xff]
      %v438 = vpack.c.bf16 %v437, %v437
      %v439 = vld [vmem:[%s1] sm:$0xf]
      %v440 = vld [vmem:[%s1 + $0x4] sm:$0xf]
      %v441 = vld [vmem:[%s1 + $0x8] sm:$0xf]
      %v442 = vld [vmem:[%s1 + $0xc] sm:$0xf]
      %v443 = vld [vmem:[%s2] sm:$0x1]
      %v445 = vlaneseq
      %v446 = vshrl.u32 %v445, 7
      %v447 = vsub.s32 0, %v446
      %v448 = vrot.slane %v443, %v447
      %v454 = vunpack.c.l.b16 %v439
      %v455 = vunpack.c.l.b16 %v440
      %v456 = vunpack.c.l.b16 %v441
      %v457 = vunpack.c.l.b16 %v442
      %v458 = vpack.c.b16 %v455, %v454
      %v459 = vpack.c.b16 %v457, %v456
      %vm462 = vcmask 261120
      %v464 = vsel %vm462, %v438, 0
      %466 = vmatprep.subr.bf16.mxu0 0
      %467 = vmatpush1.bf16.msra.mxu0 0
      %468 = vmatprep.subr.bf16.mxu0 0
      %469 = vmatpush1.bf16.msra.mxu0 0
      %470 = vmatprep.subr.bf16.mxu0 0
      %471 = vmatpush1.bf16.msra.mxu0 0
      %472 = vmatprep.subr.bf16.mxu0 0
      %473 = vmatpush1.bf16.msra.mxu0 0
      %474 = vmatprep.subr.bf16.mxu0 0
      %475 = vmatpush1.bf16.msra.mxu0 0
      %476 = vmatprep.subr.bf16.mxu0 0
      %477 = vmatpush1.bf16.msra.mxu0 0
      %478 = vmatprep.subr.bf16.mxu0 0
      %479 = vmatpush1.bf16.msra.mxu0 %v459
      %480 = vmatprep.subr.bf16.mxu0 0
      %481 = vmatpush1.bf16.msra.mxu0 %v458
      %482 = vmatprep.subr.bf16.mxu0 0
      %483 = vmatpush2.bf16.msra.mxu0 0
      %484 = vmatprep.subr.bf16.mxu0 0
      %485 = vmatpush2.bf16.msra.mxu0 0
      %486 = vmatprep.subr.bf16.mxu0 0
      %487 = vmatpush2.bf16.msra.mxu0 0
      %488 = vmatprep.subr.bf16.mxu0 0
      %489 = vmatpush2.bf16.msra.mxu0 0
      %490 = vmatprep.subr.bf16.mxu0 0
      %491 = vmatpush2.bf16.msra.mxu0 0
      %492 = vmatprep.subr.bf16.mxu0 0
      %493 = vmatpush2.bf16.msra.mxu0 0
      %494 = vmatprep.subr.bf16.mxu0 0
      %495 = vmatpush2.bf16.msra.mxu0 0
      %496 = vmatprep.subr.bf16.mxu0 0
      %497 = vmatpush2.bf16.msra.mxu0 0
      %498 = vmatprep.mubr.bf16.mxu0 0
      %499 = vmatmul.mubr.bf16.gmra.mxu0 %v464
      %v500 = vpop.f32.mrf.mxu0
      %v501 = vadd.f32 %v448, %v500
      %v502 = vpop.f32.mrf.mxu0
      %v503 = vpop.f32.mrf.mxu0
      %v504 = vpop.f32.mrf.mxu0
      %505 = vdwg.mxu0
      %v506 = vpack.c.bf16 %v501, %v501
      %508 = vrot.lane.b32.xlu0 %v506, 96
      %v509 = vpop.permute.xlu0 %508
      %vm510 = vcmask 64512
      %v512 = vsel %vm510, %v506, 0
      %v515 = vsel %vm510, %v509, 0
      %517 = vmatprep.subr.bf16.mxu0 0
      %518 = vmatpush1.bf16.xpose.msra.mxu0 0
      %519 = vmatprep.subr.bf16.mxu0 0
      %520 = vmatpush1.bf16.xpose.msra.mxu0 0
      %521 = vmatprep.subr.bf16.mxu0 0
      %522 = vmatpush1.bf16.xpose.msra.mxu0 0
      %523 = vmatprep.subr.bf16.mxu0 0
      %524 = vmatpush1.bf16.xpose.msra.mxu0 0
      %525 = vmatprep.subr.bf16.mxu0 0
      %526 = vmatpush1.bf16.xpose.msra.mxu0 0
      %527 = vmatprep.subr.bf16.mxu0 0
      %528 = vmatpush1.bf16.xpose.msra.mxu0 0
      %529 = vmatprep.subr.bf16.mxu0 0
      %530 = vmatpush1.bf16.xpose.msra.mxu0 0
      %531 = vmatprep.subr.bf16.mxu0 0
      %532 = vmatpush1.bf16.xpose.msra.mxu0 %v515
      %533 = vmatprep.subr.bf16.mxu0 0
      %534 = vmatpush2.bf16.xpose.msra.mxu0 0
      %535 = vmatprep.subr.bf16.mxu0 0
      %536 = vmatpush2.bf16.xpose.msra.mxu0 0
      %537 = vmatprep.subr.bf16.mxu0 0
      %538 = vmatpush2.bf16.xpose.msra.mxu0 0
      %539 = vmatprep.subr.bf16.mxu0 0
      %540 = vmatpush2.bf16.xpose.msra.mxu0 0
      %541 = vmatprep.subr.bf16.mxu0 0
      %542 = vmatpush2.bf16.xpose.msra.mxu0 0
      %543 = vmatprep.subr.bf16.mxu0 0
      %544 = vmatpush2.bf16.xpose.msra.mxu0 0
      %545 = vmatprep.subr.bf16.mxu0 0
      %546 = vmatpush2.bf16.xpose.msra.mxu0 0
      %547 = vmatprep.subr.bf16.mxu0 0
      %548 = vmatpush2.bf16.xpose.msra.mxu0 0
      %549 = vmatprep.mubr.bf16.mxu0 0
      %550 = vmatmul.mubr.bf16.gmra.mxu0 %v512
      %v551 = vpop.f32.mrf.mxu0
      %v552 = vadd.f32 0.0, %v551
      %v553 = vpop.f32.mrf.mxu0
      %v554 = vpop.f32.mrf.mxu0
      %v555 = vpop.f32.mrf.mxu0
      %556 = vdwg.mxu0
      %v557 = vsel %vm510, %v552, -inf
      %558 = vmax.xlane.f32.xlu0 %v557
      %v559 = vpop.xlane.xlu0 %558
      %v560 = vsub.f32 %v552, %v559
      %v561 = vmul.f32 %v560, 1.442695
      %v562 = vpow.pop %v561
      %v563 = vsel %vm510, %v562, 0.0
      %564 = vadd.xlane.f32.xlu0 %v563
      %v565 = vpop.xlane.xlu0 %564
      %v566 = vrcp.pop %v565
      %v567 = vmul.f32 %v562, %v566
      %v568 = vpack.c.bf16 %v567, %v567
      %569 = vrot.lane.b32.xlu0 %v506, 64
      %v570 = vpop.permute.xlu0 %569
      %v572 = vsel %vm510, %v568, 0
      %vm574 = vcmask 1043456
      %v576 = vsel %vm574, %v570, 0
      %578 = vmatprep.subr.bf16.mxu0 0
      %579 = vmatpush1.bf16.msra.mxu0 0
      %580 = vmatprep.subr.bf16.mxu0 0
      %581 = vmatpush1.bf16.msra.mxu0 0
      %582 = vmatprep.subr.bf16.mxu0 0
      %583 = vmatpush1.bf16.msra.mxu0 0
      %584 = vmatprep.subr.bf16.mxu0 0
      %585 = vmatpush1.bf16.msra.mxu0 0
      %586 = vmatprep.subr.bf16.mxu0 0
      %587 = vmatpush1.bf16.msra.mxu0 0
      %588 = vmatprep.subr.bf16.mxu0 0
      %589 = vmatpush1.bf16.msra.mxu0 0
      %590 = vmatprep.subr.bf16.mxu0 0
      %591 = vmatpush1.bf16.msra.mxu0 0
      %592 = vmatprep.subr.bf16.mxu0 0
      %593 = vmatpush1.bf16.msra.mxu0 %v576
      %594 = vmatprep.subr.bf16.mxu0 0
      %595 = vmatpush2.bf16.msra.mxu0 0
      %596 = vmatprep.subr.bf16.mxu0 0
      %597 = vmatpush2.bf16.msra.mxu0 0
      %598 = vmatprep.subr.bf16.mxu0 0
      %599 = vmatpush2.bf16.msra.mxu0 0
      %600 = vmatprep.subr.bf16.mxu0 0
      %601 = vmatpush2.bf16.msra.mxu0 0
      %602 = vmatprep.subr.bf16.mxu0 0
      %603 = vmatpush2.bf16.msra.mxu0 0
      %604 = vmatprep.subr.bf16.mxu0 0
      %605 = vmatpush2.bf16.msra.mxu0 0
      %606 = vmatprep.subr.bf16.mxu0 0
      %607 = vmatpush2.bf16.msra.mxu0 0
      %608 = vmatprep.subr.bf16.mxu0 0
      %609 = vmatpush2.bf16.msra.mxu0 0
      %610 = vmatprep.mubr.bf16.mxu0 0
      %611 = vmatmul.mubr.bf16.gmra.mxu0 %v572
      %v612 = vpop.f32.mrf.mxu0
      %v613 = vadd.f32 0.0, %v612
      %v614 = vpop.f32.mrf.mxu0
      %v615 = vpop.f32.mrf.mxu0
      %v616 = vpop.f32.mrf.mxu0
      %617 = vdwg.mxu0
      %618 = vrot.lane.b32.xlu0 %v506, 120
      %v619 = vpop.permute.xlu0 %618
      %620 = vrot.lane.b32.xlu0 %v506, 88
      %v621 = vpop.permute.xlu0 %620
      %v623 = vsel %vm510, %v619, 0
      %v626 = vsel %vm510, %v621, 0
      %628 = vmatprep.subr.bf16.mxu0 0
      %629 = vmatpush1.bf16.xpose.msra.mxu0 0
      %630 = vmatprep.subr.bf16.mxu0 0
      %631 = vmatpush1.bf16.xpose.msra.mxu0 0
      %632 = vmatprep.subr.bf16.mxu0 0
      %633 = vmatpush1.bf16.xpose.msra.mxu0 0
      %634 = vmatprep.subr.bf16.mxu0 0
      %635 = vmatpush1.bf16.xpose.msra.mxu0 0
      %636 = vmatprep.subr.bf16.mxu0 0
      %637 = vmatpush1.bf16.xpose.msra.mxu0 0
      %638 = vmatprep.subr.bf16.mxu0 0
      %639 = vmatpush1.bf16.xpose.msra.mxu0 0
      %640 = vmatprep.subr.bf16.mxu0 0
      %641 = vmatpush1.bf16.xpose.msra.mxu0 0
      %642 = vmatprep.subr.bf16.mxu0 0
      %643 = vmatpush1.bf16.xpose.msra.mxu0 %v626
      %644 = vmatprep.subr.bf16.mxu0 0
      %645 = vmatpush2.bf16.xpose.msra.mxu0 0
      %646 = vmatprep.subr.bf16.mxu0 0
      %647 = vmatpush2.bf16.xpose.msra.mxu0 0
      %648 = vmatprep.subr.bf16.mxu0 0
      %649 = vmatpush2.bf16.xpose.msra.mxu0 0
      %650 = vmatprep.subr.bf16.mxu0 0
      %651 = vmatpush2.bf16.xpose.msra.mxu0 0
      %652 = vmatprep.subr.bf16.mxu0 0
      %653 = vmatpush2.bf16.xpose.msra.mxu0 0
      %654 = vmatprep.subr.bf16.mxu0 0
      %655 = vmatpush2.bf16.xpose.msra.mxu0 0
      %656 = vmatprep.subr.bf16.mxu0 0
      %657 = vmatpush2.bf16.xpose.msra.mxu0 0
      %658 = vmatprep.subr.bf16.mxu0 0
      %659 = vmatpush2.bf16.xpose.msra.mxu0 0
      %660 = vmatprep.mubr.bf16.mxu0 0
      %661 = vmatmul.mubr.bf16.gmra.mxu0 %v623
      %v662 = vpop.f32.mrf.mxu0
      %v663 = vadd.f32 0.0, %v662
      %v664 = vpop.f32.mrf.mxu0
      %v665 = vpop.f32.mrf.mxu0
      %v666 = vpop.f32.mrf.mxu0
      %667 = vdwg.mxu0
      %v668 = vsel %vm510, %v663, -inf
      %669 = vmax.xlane.f32.xlu0 %v668
      %v670 = vpop.xlane.xlu0 %669
      %v671 = vsub.f32 %v663, %v670
      %v672 = vmul.f32 %v671, 1.442695
      %v673 = vpow.pop %v672
      %v674 = vsel %vm510, %v673, 0.0
      %675 = vadd.xlane.f32.xlu0 %v674
      %v676 = vpop.xlane.xlu0 %675
      %v677 = vrcp.pop %v676
      %v678 = vmul.f32 %v673, %v677
      %v679 = vpack.c.bf16 %v678, %v678
      %680 = vrot.lane.b32.xlu0 %v506, 56
      %v681 = vpop.permute.xlu0 %680
      %v683 = vsel %vm510, %v679, 0
      %v686 = vsel %vm574, %v681, 0
      %688 = vmatprep.subr.bf16.mxu0 0
      %689 = vmatpush1.bf16.msra.mxu0 0
      %690 = vmatprep.subr.bf16.mxu0 0
      %691 = vmatpush1.bf16.msra.mxu0 0
      %692 = vmatprep.subr.bf16.mxu0 0
      %693 = vmatpush1.bf16.msra.mxu0 0
      %694 = vmatprep.subr.bf16.mxu0 0
      %695 = vmatpush1.bf16.msra.mxu0 0
      %696 = vmatprep.subr.bf16.mxu0 0
      %697 = vmatpush1.bf16.msra.mxu0 0
      %698 = vmatprep.subr.bf16.mxu0 0
      %699 = vmatpush1.bf16.msra.mxu0 0
      %700 = vmatprep.subr.bf16.mxu0 0
      %701 = vmatpush1.bf16.msra.mxu0 0
      %702 = vmatprep.subr.bf16.mxu0 0
      %703 = vmatpush1.bf16.msra.mxu0 %v686
      %704 = vmatprep.subr.bf16.mxu0 0
      %705 = vmatpush2.bf16.msra.mxu0 0
      %706 = vmatprep.subr.bf16.mxu0 0
      %707 = vmatpush2.bf16.msra.mxu0 0
      %708 = vmatprep.subr.bf16.mxu0 0
      %709 = vmatpush2.bf16.msra.mxu0 0
      %710 = vmatprep.subr.bf16.mxu0 0
      %711 = vmatpush2.bf16.msra.mxu0 0
      %712 = vmatprep.subr.bf16.mxu0 0
      %713 = vmatpush2.bf16.msra.mxu0 0
      %714 = vmatprep.subr.bf16.mxu0 0
      %715 = vmatpush2.bf16.msra.mxu0 0
      %716 = vmatprep.subr.bf16.mxu0 0
      %717 = vmatpush2.bf16.msra.mxu0 0
      %718 = vmatprep.subr.bf16.mxu0 0
      %719 = vmatpush2.bf16.msra.mxu0 0
      %720 = vmatprep.mubr.bf16.mxu0 0
      %721 = vmatmul.mubr.bf16.gmra.mxu0 %v683
      %v722 = vpop.f32.mrf.mxu0
      %v723 = vadd.f32 0.0, %v722
      %v724 = vpop.f32.mrf.mxu0
      %v725 = vpop.f32.mrf.mxu0
      %v726 = vpop.f32.mrf.mxu0
      %727 = vdwg.mxu0
      %728 = vrot.lane.b32.xlu0 %v506, 112
      %v729 = vpop.permute.xlu0 %728
      %730 = vrot.lane.b32.xlu0 %v506, 80
      %v731 = vpop.permute.xlu0 %730
      %v733 = vsel %vm510, %v729, 0
      %v736 = vsel %vm510, %v731, 0
      %738 = vmatprep.subr.bf16.mxu0 0
      %739 = vmatpush1.bf16.xpose.msra.mxu0 0
      %740 = vmatprep.subr.bf16.mxu0 0
      %741 = vmatpush1.bf16.xpose.msra.mxu0 0
      %742 = vmatprep.subr.bf16.mxu0 0
      %743 = vmatpush1.bf16.xpose.msra.mxu0 0
      %744 = vmatprep.subr.bf16.mxu0 0
      %745 = vmatpush1.bf16.xpose.msra.mxu0 0
      %746 = vmatprep.subr.bf16.mxu0 0
      %747 = vmatpush1.bf16.xpose.msra.mxu0 0
      %748 = vmatprep.subr.bf16.mxu0 0
      %749 = vmatpush1.bf16.xpose.msra.mxu0 0
      %750 = vmatprep.subr.bf16.mxu0 0
      %751 = vmatpush1.bf16.xpose.msra.mxu0 0
      %752 = vmatprep.subr.bf16.mxu0 0
      %753 = vmatpush1.bf16.xpose.msra.mxu0 %v736
      %754 = vmatprep.subr.bf16.mxu0 0
      %755 = vmatpush2.bf16.xpose.msra.mxu0 0
      %756 = vmatprep.subr.bf16.mxu0 0
      %757 = vmatpush2.bf16.xpose.msra.mxu0 0
      %758 = vmatprep.subr.bf16.mxu0 0
      %759 = vmatpush2.bf16.xpose.msra.mxu0 0
      %760 = vmatprep.subr.bf16.mxu0 0
      %761 = vmatpush2.bf16.xpose.msra.mxu0 0
      %762 = vmatprep.subr.bf16.mxu0 0
      %763 = vmatpush2.bf16.xpose.msra.mxu0 0
      %764 = vmatprep.subr.bf16.mxu0 0
      %765 = vmatpush2.bf16.xpose.msra.mxu0 0
      %766 = vmatprep.subr.bf16.mxu0 0
      %767 = vmatpush2.bf16.xpose.msra.mxu0 0
      %768 = vmatprep.subr.bf16.mxu0 0
      %769 = vmatpush2.bf16.xpose.msra.mxu0 0
      %770 = vmatprep.mubr.bf16.mxu0 0
      %771 = vmatmul.mubr.bf16.gmra.mxu0 %v733
      %v772 = vpop.f32.mrf.mxu0
      %v773 = vadd.f32 0.0, %v772
      %v774 = vpop.f32.mrf.mxu0
      %v775 = vpop.f32.mrf.mxu0
      %v776 = vpop.f32.mrf.mxu0
      %777 = vdwg.mxu0
      %v778 = vsel %vm510, %v773, -inf
      %779 = vmax.xlane.f32.xlu0 %v778
      %v780 = vpop.xlane.xlu0 %779
      %v781 = vsub.f32 %v773, %v780
      %v782 = vmul.f32 %v781, 1.442695
      %v783 = vpow.pop %v782
      %v784 = vsel %vm510, %v783, 0.0
      %785 = vadd.xlane.f32.xlu0 %v784
      %v786 = vpop.xlane.xlu0 %785
      %v787 = vrcp.pop %v786
      %v788 = vmul.f32 %v783, %v787
      %v789 = vpack.c.bf16 %v788, %v788
      %790 = vrot.lane.b32.xlu0 %v506, 48
      %v791 = vpop.permute.xlu0 %790
      %v793 = vsel %vm510, %v789, 0
      %v796 = vsel %vm574, %v791, 0
      %798 = vmatprep.subr.bf16.mxu0 0
      %799 = vmatpush1.bf16.msra.mxu0 0
      %800 = vmatprep.subr.bf16.mxu0 0
      %801 = vmatpush1.bf16.msra.mxu0 0
      %802 = vmatprep.subr.bf16.mxu0 0
      %803 = vmatpush1.bf16.msra.mxu0 0
      %804 = vmatprep.subr.bf16.mxu0 0
      %805 = vmatpush1.bf16.msra.mxu0 0
      %806 = vmatprep.subr.bf16.mxu0 0
      %807 = vmatpush1.bf16.msra.mxu0 0
      %808 = vmatprep.subr.bf16.mxu0 0
      %809 = vmatpush1.bf16.msra.mxu0 0
      %810 = vmatprep.subr.bf16.mxu0 0
      %811 = vmatpush1.bf16.msra.mxu0 0
      %812 = vmatprep.subr.bf16.mxu0 0
      %813 = vmatpush1.bf16.msra.mxu0 %v796
      %814 = vmatprep.subr.bf16.mxu0 0
      %815 = vmatpush2.bf16.msra.mxu0 0
      %816 = vmatprep.subr.bf16.mxu0 0
      %817 = vmatpush2.bf16.msra.mxu0 0
      %818 = vmatprep.subr.bf16.mxu0 0
      %819 = vmatpush2.bf16.msra.mxu0 0
      %820 = vmatprep.subr.bf16.mxu0 0
      %821 = vmatpush2.bf16.msra.mxu0 0
      %822 = vmatprep.subr.bf16.mxu0 0
      %823 = vmatpush2.bf16.msra.mxu0 0
      %824 = vmatprep.subr.bf16.mxu0 0
      %825 = vmatpush2.bf16.msra.mxu0 0
      %826 = vmatprep.subr.bf16.mxu0 0
      %827 = vmatpush2.bf16.msra.mxu0 0
      %828 = vmatprep.subr.bf16.mxu0 0
      %829 = vmatpush2.bf16.msra.mxu0 0
      %830 = vmatprep.mubr.bf16.mxu0 0
      %831 = vmatmul.mubr.bf16.gmra.mxu0 %v793
      %v832 = vpop.f32.mrf.mxu0
      %v833 = vadd.f32 0.0, %v832
      %v834 = vpop.f32.mrf.mxu0
      %v835 = vpop.f32.mrf.mxu0
      %v836 = vpop.f32.mrf.mxu0
      %837 = vdwg.mxu0
      %838 = vrot.lane.b32.xlu0 %v506, 104
      %v839 = vpop.permute.xlu0 %838
      %840 = vrot.lane.b32.xlu0 %v506, 72
      %v841 = vpop.permute.xlu0 %840
      %v843 = vsel %vm510, %v839, 0
      %v846 = vsel %vm510, %v841, 0
      %848 = vmatprep.subr.bf16.mxu0 0
      %849 = vmatpush1.bf16.xpose.msra.mxu0 0
      %850 = vmatprep.subr.bf16.mxu0 0
      %851 = vmatpush1.bf16.xpose.msra.mxu0 0
      %852 = vmatprep.subr.bf16.mxu0 0
      %853 = vmatpush1.bf16.xpose.msra.mxu0 0
      %854 = vmatprep.subr.bf16.mxu0 0
      %855 = vmatpush1.bf16.xpose.msra.mxu0 0
      %856 = vmatprep.subr.bf16.mxu0 0
      %857 = vmatpush1.bf16.xpose.msra.mxu0 0
      %858 = vmatprep.subr.bf16.mxu0 0
      %859 = vmatpush1.bf16.xpose.msra.mxu0 0
      %860 = vmatprep.subr.bf16.mxu0 0
      %861 = vmatpush1.bf16.xpose.msra.mxu0 0
      %862 = vmatprep.subr.bf16.mxu0 0
      %863 = vmatpush1.bf16.xpose.msra.mxu0 %v846
      %864 = vmatprep.subr.bf16.mxu0 0
      %865 = vmatpush2.bf16.xpose.msra.mxu0 0
      %866 = vmatprep.subr.bf16.mxu0 0
      %867 = vmatpush2.bf16.xpose.msra.mxu0 0
      %868 = vmatprep.subr.bf16.mxu0 0
      %869 = vmatpush2.bf16.xpose.msra.mxu0 0
      %870 = vmatprep.subr.bf16.mxu0 0
      %871 = vmatpush2.bf16.xpose.msra.mxu0 0
      %872 = vmatprep.subr.bf16.mxu0 0
      %873 = vmatpush2.bf16.xpose.msra.mxu0 0
      %874 = vmatprep.subr.bf16.mxu0 0
      %875 = vmatpush2.bf16.xpose.msra.mxu0 0
      %876 = vmatprep.subr.bf16.mxu0 0
      %877 = vmatpush2.bf16.xpose.msra.mxu0 0
      %878 = vmatprep.subr.bf16.mxu0 0
      %879 = vmatpush2.bf16.xpose.msra.mxu0 0
      %880 = vmatprep.mubr.bf16.mxu0 0
      %881 = vmatmul.mubr.bf16.gmra.mxu0 %v843
      %v882 = vpop.f32.mrf.mxu0
      %v883 = vadd.f32 0.0, %v882
      %v884 = vpop.f32.mrf.mxu0
      %v885 = vpop.f32.mrf.mxu0
      %v886 = vpop.f32.mrf.mxu0
      %887 = vdwg.mxu0
      %v888 = vsel %vm510, %v883, -inf
      %889 = vmax.xlane.f32.xlu0 %v888
      %v890 = vpop.xlane.xlu0 %889
      %v891 = vsub.f32 %v883, %v890
      %v892 = vmul.f32 %v891, 1.442695
      %v893 = vpow.pop %v892
      %v894 = vsel %vm510, %v893, 0.0
      %895 = vadd.xlane.f32.xlu0 %v894
      %v896 = vpop.xlane.xlu0 %895
      %v897 = vrcp.pop %v896
      %v898 = vmul.f32 %v893, %v897
      %v899 = vpack.c.bf16 %v898, %v898
      %900 = vrot.lane.b32.xlu0 %v506, 40
      %v901 = vpop.permute.xlu0 %900
      %v903 = vsel %vm510, %v899, 0
      %v906 = vsel %vm574, %v901, 0
      %908 = vmatprep.subr.bf16.mxu0 0
      %909 = vmatpush1.bf16.msra.mxu0 0
      %910 = vmatprep.subr.bf16.mxu0 0
      %911 = vmatpush1.bf16.msra.mxu0 0
      %912 = vmatprep.subr.bf16.mxu0 0
      %913 = vmatpush1.bf16.msra.mxu0 0
      %914 = vmatprep.subr.bf16.mxu0 0
      %915 = vmatpush1.bf16.msra.mxu0 0
      %916 = vmatprep.subr.bf16.mxu0 0
      %917 = vmatpush1.bf16.msra.mxu0 0
      %918 = vmatprep.subr.bf16.mxu0 0
      %919 = vmatpush1.bf16.msra.mxu0 0
      %920 = vmatprep.subr.bf16.mxu0 0
      %921 = vmatpush1.bf16.msra.mxu0 0
      %922 = vmatprep.subr.bf16.mxu0 0
      %923 = vmatpush1.bf16.msra.mxu0 %v906
      %924 = vmatprep.subr.bf16.mxu0 0
      %925 = vmatpush2.bf16.msra.mxu0 0
      %926 = vmatprep.subr.bf16.mxu0 0
      %927 = vmatpush2.bf16.msra.mxu0 0
      %928 = vmatprep.subr.bf16.mxu0 0
      %929 = vmatpush2.bf16.msra.mxu0 0
      %930 = vmatprep.subr.bf16.mxu0 0
      %931 = vmatpush2.bf16.msra.mxu0 0
      %932 = vmatprep.subr.bf16.mxu0 0
      %933 = vmatpush2.bf16.msra.mxu0 0
      %934 = vmatprep.subr.bf16.mxu0 0
      %935 = vmatpush2.bf16.msra.mxu0 0
      %936 = vmatprep.subr.bf16.mxu0 0
      %937 = vmatpush2.bf16.msra.mxu0 0
      %938 = vmatprep.subr.bf16.mxu0 0
      %939 = vmatpush2.bf16.msra.mxu0 0
      %940 = vmatprep.mubr.bf16.mxu0 0
      %941 = vmatmul.mubr.bf16.gmra.mxu0 %v903
      %v942 = vpop.f32.mrf.mxu0
      %v943 = vadd.f32 0.0, %v942
      %v944 = vpop.f32.mrf.mxu0
      %v945 = vpop.f32.mrf.mxu0
      %v946 = vpop.f32.mrf.mxu0
      %947 = vdwg.mxu0
      %949 = vrot.lane.b32.xlu0 %v723, 8
      %v950 = vpop.permute.xlu0 %949
      %953 = vrot.lane.b32.xlu0 %v833, 16
      %v954 = vpop.permute.xlu0 %953
      %957 = vrot.lane.b32.xlu0 %v943, 24
      %v958 = vpop.permute.xlu0 %957
      %v960 = vsel %vm510, %v613, %v950
      %vm961 = vcmask 130048
      %v962 = vsel %vm961, %v960, %v954
      %vm963 = vcmask 195584
      %v964 = vsel %vm963, %v962, %v958
      %v965 = vpack.c.bf16 %v964, %v964
      %v966 = vld [vmem:[%s3] sm:$0xf]
      %v967 = vld [vmem:[%s3 + $0x4] sm:$0xf]
      %v968 = vld [vmem:[%s3 + $0x8] sm:$0xf]
      %v969 = vld [vmem:[%s3 + $0xc] sm:$0xf]
      %v970 = vld [vmem:[%s4] sm:$0x1]
      %v972 = vlaneseq
      %v973 = vshrl.u32 %v972, 7
      %v974 = vsub.s32 0, %v973
      %v975 = vrot.slane %v970, %v974
      %v981 = vunpack.c.l.b16 %v966
      %v982 = vunpack.c.l.b16 %v967
      %v983 = vunpack.c.l.b16 %v968
      %v984 = vunpack.c.l.b16 %v969
      %v985 = vpack.c.b16 %v982, %v981
      %v986 = vpack.c.b16 %v984, %v983
      %v990 = vsel %vm462, %v965, 0
      %992 = vmatprep.subr.bf16.mxu0 0
      %993 = vmatpush1.bf16.msra.mxu0 0
      %994 = vmatprep.subr.bf16.mxu0 0
      %995 = vmatpush1.bf16.msra.mxu0 0
      %996 = vmatprep.subr.bf16.mxu0 0
      %997 = vmatpush1.bf16.msra.mxu0 0
      %998 = vmatprep.subr.bf16.mxu0 0
      %999 = vmatpush1.bf16.msra.mxu0 0
      %1000 = vmatprep.subr.bf16.mxu0 0
      %1001 = vmatpush1.bf16.msra.mxu0 0
      %1002 = vmatprep.subr.bf16.mxu0 0
      %1003 = vmatpush1.bf16.msra.mxu0 0
      %1004 = vmatprep.subr.bf16.mxu0 0
      %1005 = vmatpush1.bf16.msra.mxu0 %v986
      %1006 = vmatprep.subr.bf16.mxu0 0
      %1007 = vmatpush1.bf16.msra.mxu0 %v985
      %1008 = vmatprep.subr.bf16.mxu0 0
      %1009 = vmatpush2.bf16.msra.mxu0 0
      %1010 = vmatprep.subr.bf16.mxu0 0
      %1011 = vmatpush2.bf16.msra.mxu0 0
      %1012 = vmatprep.subr.bf16.mxu0 0
      %1013 = vmatpush2.bf16.msra.mxu0 0
      %1014 = vmatprep.subr.bf16.mxu0 0
      %1015 = vmatpush2.bf16.msra.mxu0 0
      %1016 = vmatprep.subr.bf16.mxu0 0
      %1017 = vmatpush2.bf16.msra.mxu0 0
      %1018 = vmatprep.subr.bf16.mxu0 0
      %1019 = vmatpush2.bf16.msra.mxu0 0
      %1020 = vmatprep.subr.bf16.mxu0 0
      %1021 = vmatpush2.bf16.msra.mxu0 0
      %1022 = vmatprep.subr.bf16.mxu0 0
      %1023 = vmatpush2.bf16.msra.mxu0 0
      %1024 = vmatprep.mubr.bf16.mxu0 0
      %1025 = vmatmul.mubr.bf16.gmra.mxu0 %v990
      %v1026 = vpop.f32.mrf.mxu0
      %v1027 = vadd.f32 %v975, %v1026
      %v1028 = vpop.f32.mrf.mxu0
      %v1029 = vpop.f32.mrf.mxu0
      %v1030 = vpop.f32.mrf.mxu0
      %1031 = vdwg.mxu0
      %v1032 = vadd.f32 %v437, %v1027
      %v1033 = vld [vmem:[%s9] sm:$0x1]
      %v1034 = vld [vmem:[%s10] sm:$0x1]
      %v1035 = vsel %vm462, %v1032, 0.0
      %1036 = vadd.xlane.f32.xlu0 %v1035
      %v1037 = vpop.xlane.xlu0 %1036
      %v1038 = vrcp.pop 32.0
      %v1039 = vmul.f32 %v1037, %v1038
      %v1040 = vmul.f32 %v1032, %v1032
      %v1041 = vsel %vm462, %v1040, 0.0
      %1042 = vadd.xlane.f32.xlu0 %v1041
      %v1043 = vpop.xlane.xlu0 %1042
      %v1044 = vmul.f32 %v1043, %v1038
      %v1045 = vmul.f32 %v1039, %v1039
      %v1046 = vsub.f32 %v1044, %v1045
      %v1047 = vsub.f32 %v1032, %v1039
      %v1048 = vadd.f32 %v1046, 1e-05
      %v1049 = vrsqrt.pop %v1048
      %v1050 = vmul.f32 %v1047, %v1049
      %v1052 = vlaneseq
      %v1053 = vshrl.u32 %v1052, 7
      %v1054 = vsub.s32 0, %v1053
      %v1055 = vrot.slane %v1033, %v1054
      %v1057 = vmul.f32 %v1050, %v1055
      %v1059 = vlaneseq
      %v1060 = vshrl.u32 %v1059, 7
      %v1061 = vsub.s32 0, %v1060
      %v1062 = vrot.slane %v1034, %v1061
      %v1064 = vadd.f32 %v1057, %v1062
      %v1065 = vpack.c.bf16 %v1064, %v1064
      %v1066 = vld [vmem:[%s5] sm:$0xf]
      %v1067 = vld [vmem:[%s5 + $0x4] sm:$0xf]
      %v1068 = vld [vmem:[%s5 + $0x8] sm:$0xf]
      %v1069 = vld [vmem:[%s5 + $0xc] sm:$0xf]
      %v1070 = vld [vmem:[%s6] sm:$0x1]
      %v1072 = vlaneseq
      %v1073 = vshrl.u32 %v1072, 7
      %v1074 = vsub.s32 0, %v1073
      %v1075 = vrot.slane %v1070, %v1074
      %v1081 = vunpack.c.l.b16 %v1066
      %v1082 = vunpack.c.l.b16 %v1067
      %v1083 = vunpack.c.l.b16 %v1068
      %v1084 = vunpack.c.l.b16 %v1069
      %v1085 = vpack.c.b16 %v1082, %v1081
      %v1086 = vpack.c.b16 %v1084, %v1083
      %v1090 = vsel %vm462, %v1065, 0
      %1092 = vmatprep.subr.bf16.mxu0 0
      %1093 = vmatpush1.bf16.msra.mxu0 0
      %1094 = vmatprep.subr.bf16.mxu0 0
      %1095 = vmatpush1.bf16.msra.mxu0 0
      %1096 = vmatprep.subr.bf16.mxu0 0
      %1097 = vmatpush1.bf16.msra.mxu0 0
      %1098 = vmatprep.subr.bf16.mxu0 0
      %1099 = vmatpush1.bf16.msra.mxu0 0
      %1100 = vmatprep.subr.bf16.mxu0 0
      %1101 = vmatpush1.bf16.msra.mxu0 0
      %1102 = vmatprep.subr.bf16.mxu0 0
      %1103 = vmatpush1.bf16.msra.mxu0 0
      %1104 = vmatprep.subr.bf16.mxu0 0
      %1105 = vmatpush1.bf16.msra.mxu0 %v1086
      %1106 = vmatprep.subr.bf16.mxu0 0
      %1107 = vmatpush1.bf16.msra.mxu0 %v1085
      %1108 = vmatprep.subr.bf16.mxu0 0
      %1109 = vmatpush2.bf16.msra.mxu0 0
      %1110 = vmatprep.subr.bf16.mxu0 0
      %1111 = vmatpush2.bf16.msra.mxu0 0
      %1112 = vmatprep.subr.bf16.mxu0 0
      %1113 = vmatpush2.bf16.msra.mxu0 0
      %1114 = vmatprep.subr.bf16.mxu0 0
      %1115 = vmatpush2.bf16.msra.mxu0 0
      %1116 = vmatprep.subr.bf16.mxu0 0
      %1117 = vmatpush2.bf16.msra.mxu0 0
      %1118 = vmatprep.subr.bf16.mxu0 0
      %1119 = vmatpush2.bf16.msra.mxu0 0
      %1120 = vmatprep.subr.bf16.mxu0 0
      %1121 = vmatpush2.bf16.msra.mxu0 0
      %1122 = vmatprep.subr.bf16.mxu0 0
      %1123 = vmatpush2.bf16.msra.mxu0 0
      %1124 = vmatprep.mubr.bf16.mxu0 0
      %1125 = vmatmul.mubr.bf16.gmra.mxu0 %v1090
      %v1126 = vpop.f32.mrf.mxu0
      %v1127 = vadd.f32 %v1075, %v1126
      %v1128 = vpop.f32.mrf.mxu0
      %v1129 = vpop.f32.mrf.mxu0
      %v1130 = vpop.f32.mrf.mxu0
      %1131 = vdwg.mxu0
      %v1132 = vmax.f32 %v1127, 0.0
      %v1133 = vpack.c.bf16 %v1132, %v1132
      %v1134 = vld [vmem:[%s7] sm:$0xf]
      %v1135 = vld [vmem:[%s7 + $0x4] sm:$0xf]
      %v1136 = vld [vmem:[%s7 + $0x8] sm:$0xf]
      %v1137 = vld [vmem:[%s7 + $0xc] sm:$0xf]
      %v1138 = vld [vmem:[%s7 + $0x10] sm:$0xf]
      %v1139 = vld [vmem:[%s7 + $0x14] sm:$0xf]
      %v1140 = vld [vmem:[%s7 + $0x18] sm:$0xf]
      %v1141 = vld [vmem:[%s7 + $0x1c] sm:$0xf]
      %v1142 = vld [vmem:[%s8] sm:$0x1]
      %v1144 = vlaneseq
      %v1145 = vshrl.u32 %v1144, 7
      %v1146 = vsub.s32 0, %v1145
      %v1147 = vrot.slane %v1142, %v1146
      %v1157 = vunpack.c.l.b16 %v1134
      %v1158 = vunpack.c.l.b16 %v1135
      %v1159 = vunpack.c.l.b16 %v1136
      %v1160 = vunpack.c.l.b16 %v1137
      %v1161 = vunpack.c.l.b16 %v1138
      %v1162 = vunpack.c.l.b16 %v1139
      %v1163 = vunpack.c.l.b16 %v1140
      %v1164 = vunpack.c.l.b16 %v1141
      %v1165 = vpack.c.b16 %v1158, %v1157
      %v1166 = vpack.c.b16 %v1160, %v1159
      %v1167 = vpack.c.b16 %v1162, %v1161
      %v1168 = vpack.c.b16 %v1164, %v1163
      %vm1173 = vcmask 523264
      %v1175 = vsel %vm1173, %v1133, 0
      %1177 = vmatprep.subr.bf16.mxu0 0
      %1178 = vmatpush1.bf16.msra.mxu0 0
      %1179 = vmatprep.subr.bf16.mxu0 0
      %1180 = vmatpush1.bf16.msra.mxu0 0
      %1181 = vmatprep.subr.bf16.mxu0 0
      %1182 = vmatpush1.bf16.msra.mxu0 0
      %1183 = vmatprep.subr.bf16.mxu0 0
      %1184 = vmatpush1.bf16.msra.mxu0 0
      %1185 = vmatprep.subr.bf16.mxu0 0
      %1186 = vmatpush1.bf16.msra.mxu0 %v1168
      %1187 = vmatprep.subr.bf16.mxu0 0
      %1188 = vmatpush1.bf16.msra.mxu0 %v1167
      %1189 = vmatprep.subr.bf16.mxu0 0
      %1190 = vmatpush1.bf16.msra.mxu0 %v1166
      %1191 = vmatprep.subr.bf16.mxu0 0
      %1192 = vmatpush1.bf16.msra.mxu0 %v1165
      %1193 = vmatprep.subr.bf16.mxu0 0
      %1194 = vmatpush2.bf16.msra.mxu0 0
      %1195 = vmatprep.subr.bf16.mxu0 0
      %1196 = vmatpush2.bf16.msra.mxu0 0
      %1197 = vmatprep.subr.bf16.mxu0 0
      %1198 = vmatpush2.bf16.msra.mxu0 0
      %1199 = vmatprep.subr.bf16.mxu0 0
      %1200 = vmatpush2.bf16.msra.mxu0 0
      %1201 = vmatprep.subr.bf16.mxu0 0
      %1202 = vmatpush2.bf16.msra.mxu0 0
      %1203 = vmatprep.subr.bf16.mxu0 0
      %1204 = vmatpush2.bf16.msra.mxu0 0
      %1205 = vmatprep.subr.bf16.mxu0 0
      %1206 = vmatpush2.bf16.msra.mxu0 0
      %1207 = vmatprep.subr.bf16.mxu0 0
      %1208 = vmatpush2.bf16.msra.mxu0 0
      %1209 = vmatprep.mubr.bf16.mxu0 0
      %1210 = vmatmul.mubr.bf16.gmra.mxu0 %v1175
      %v1211 = vpop.f32.mrf.mxu0
      %v1212 = vadd.f32 %v1147, %v1211
      %v1213 = vpop.f32.mrf.mxu0
      %v1214 = vpop.f32.mrf.mxu0
      %v1215 = vpop.f32.mrf.mxu0
      %1216 = vdwg.mxu0
      %v1217 = vadd.f32 %v1064, %v1212
      %v1218 = vld [vmem:[%s11] sm:$0x1]
      %v1219 = vld [vmem:[%s12] sm:$0x1]
      %v1220 = vsel %vm462, %v1217, 0.0
      %1221 = vadd.xlane.f32.xlu0 %v1220
      %v1222 = vpop.xlane.xlu0 %1221
      %v1223 = vmul.f32 %v1222, %v1038
      %v1224 = vmul.f32 %v1217, %v1217
      %v1225 = vsel %vm462, %v1224, 0.0
      %1226 = vadd.xlane.f32.xlu0 %v1225
      %v1227 = vpop.xlane.xlu0 %1226
      %v1228 = vmul.f32 %v1227, %v1038
      %v1229 = vmul.f32 %v1223, %v1223
      %v1230 = vsub.f32 %v1228, %v1229
      %v1231 = vsub.f32 %v1217, %v1223
      %v1232 = vadd.f32 %v1230, 1e-05
      %v1233 = vrsqrt.pop %v1232
      %v1234 = vmul.f32 %v1231, %v1233
      %v1236 = vlaneseq
      %v1237 = vshrl.u32 %v1236, 7
      %v1238 = vsub.s32 0, %v1237
      %v1239 = vrot.slane %v1218, %v1238
      %v1241 = vmul.f32 %v1234, %v1239
      %v1243 = vlaneseq
      %v1244 = vshrl.u32 %v1243, 7
      %v1245 = vsub.s32 0, %v1244
      %v1246 = vrot.slane %v1219, %v1245
      %v1248 = vadd.f32 %v1241, %v1246
      %1249 = vst.msk [vmem:[%s435] sm:$0xff] %vm462, %v1248
      %p1250 = scmp.lt.s32.totalorder %s24, 1
      %s1251 = scalar_select %p1250, %s24, 1
      %s1252 = smul.addr %s1251, 8
      %s1253 = scalar_lea.vmem %s13, %s1252
      // Predicated region
      $region73: #{transformer_encoder_layer.1} parent=71 // pred_check
        %p1254 = pneg %p320
      $region74: #{transformer_encoder_layer.1} parent=71 // pred_check_branch
        %1256 = sbr.rel (%p1254) target = $region76
      $region75: #{transformer_encoder_layer.1} parent=71 // pred_region
        _
      $region76: #{transformer_encoder_layer.1} parent=71 // pred_fallthru
        _
    $region72: #{transformer_encoder_layer.1} parent=5 // pred_fallthru
      _
    %p1257 = scmp.le.s32.totalorder 2, %s19
    // Predicated region
    $region77: #{transformer_encoder_layer.1} parent=5 // pred_check
      %p1258 = pneg %p1257
    $region78: #{transformer_encoder_layer.1} parent=5 // pred_check_branch
      %1260 = sbr.rel (%p1258) target = $region80
    $region79: #{transformer_encoder_layer.1} parent=5 // pred_region
      %s1261 = ssub.s32 %s19, 2
      // Predicated region
      $region81: #{transformer_encoder_layer.1} parent=79 // pred_check
        %p1262 = pneg %p326
      $region82: #{transformer_encoder_layer.1} parent=79 // pred_check_branch
        %1264 = sbr.rel (%p1262) target = $region84
      $region83: #{transformer_encoder_layer.1} parent=79 // pred_region
        %p1265 = scmp.lt.s32.totalorder %s25, 1
        %s1266 = scalar_select %p1265, %s25, 1
        %s1267 = smul.addr %s1266, 8
        %s1268 = scalar_lea.vmem %s13, %s1267
      $region84: #{transformer_encoder_layer.1} parent=79 // pred_fallthru
        _
    $region80: #{transformer_encoder_layer.1} parent=5 // pred_fallthru
      _
  $region6: #{transformer_encoder_layer.1} parent=0 // loop_footer
    %s23 = sadd.s32 1, %s19
  $region7: #{transformer_encoder_layer.1} parent=0 // loop_footer_branch
    %18 = sbr.rel target = $region3
  $region8: #{transformer_encoder_layer.1} parent=0 // loop_exit
    _

</llo_original>
